<compile_context>
chip_gen: v6e
topology: v6e:2x2x1
jax: 0.10.0
libtpu: 0.0.40
codegen_flags: <defaults>
</compile_context>

<pallas_src>
import functools

import jax
import jax.numpy as jnp
from jax.experimental import pallas as pl
from jax.experimental.pallas import tpu as pltpu


def _head_group_size(head: int, dh: int) -> int:
    """Largest divisor g of `head` with g*dh <= 128 (lane-dense group stores)."""
    g = 1
    for cand in range(1, head + 1):
        if head % cand == 0 and cand * dh <= 128:
            g = cand
    return g


def _vmem_budget_bytes() -> int:
    """VMEM budget for tile planning / vmem_limit_bytes (narrow HW query with a
    conservative fallback; this is a capability probe, not error swallowing)."""
    try:
        cap = int(pltpu.get_tpu_info().vmem_capacity_bytes)
    except Exception:
        cap = 64 << 20            # conservative: v7x per-core physical VMEM
    return min((cap * 3) // 4, 112 << 20)


def _plan_tq(n: int, d: int, mm_bytes: int, out_bytes: int, budget: int) -> int:
    """Pick the query-tile length.  Prefer the fused tq == n path (single wide
    QKV projection, no K/V recompute); otherwise the largest MXU-friendly tile
    whose working set fits the VMEM budget (256 suits v6e/v7x's 256-wide MXU,
    128 is already full-width on v5e)."""
    w_bytes = 2 * (4 * d * d * mm_bytes + 4 * d * 4)      # dbl-buffered W + f32 b

    def est(tq, fused):
        act = 2 * ((tq if fused else tq + n) * d) * mm_bytes   # dbl-buffered x blocks
        out = 2 * tq * d * out_bytes
        scratch = ((n * 3 * d) if fused else (tq * d + n * 2 * d)) * mm_bytes
        scratch += tq * d * mm_bytes                            # attention slab
        temps = tq * 3 * d * 4 + 4 * tq * n * 4                 # f32 proj / score / exp
        return w_bytes + act + out + scratch + temps

    if est(n, True) <= budget:
        return n
    for tq in (256, 128):
        if tq < n and est(tq, False) <= budget:
            return tq
    return 128 if n > 128 else n


def _attend(q_ref, kv_ref, attn_ref, *, head, dh, group, k_off, v_off,
            approx_recip):
    """Per-head attention.

    q_ref   : scratch holding Q; head h lives in columns [h*dh, (h+1)*dh)
              (the 1/sqrt(D) scale is folded into the Q weights host-side).
    kv_ref  : scratch holding K at columns [k_off, k_off+D) and V at
              [v_off, v_off+D).
    attn_ref: (tq, D) scratch receiving the concatenated per-head outputs,
              already in the matmul operand dtype.

    Heads are processed in groups of `group` so each attn_ref store is one
    lane-dense slab (group*dh lanes; 128 for the typical dh=64 pairing) instead
    of several masked 64-lane stores.
    """
    mm = kv_ref.dtype
    for g0 in range(0, head, group):
        outs = []
        for h in range(g0, g0 + group):
            lo = h * dh
            qh = q_ref[:, lo:lo + dh]                        # (tq, dh)
            kh = kv_ref[:, k_off + lo:k_off + lo + dh]       # (n,  dh)
            vh = kv_ref[:, v_off + lo:v_off + lo + dh]       # (n,  dh)
            # NOTE: these matmuls contract over only dh (typically 64) of the
            # MXU depth; tq / n are kept as large as VMEM allows to compensate.
            s = jax.lax.dot_general(qh, kh, (((1,), (1,)), ((), ())),
                                    preferred_element_type=jnp.float32)  # (tq, n)
            s = s - jnp.max(s, axis=-1, keepdims=True)        # stable softmax
            e = jnp.exp(s)
            denom = jnp.sum(e, axis=-1, keepdims=True)
            # Normalize AFTER the PV matmul: (tq, dh) multiply instead of (tq, n).
            oh = jnp.dot(e.astype(mm), vh, preferred_element_type=jnp.float32)
            oh = oh * pl.reciprocal(denom, approx=approx_recip)
            outs.append(oh.astype(attn_ref.dtype))
        blk = outs[0] if len(outs) == 1 else jnp.concatenate(outs, axis=-1)
        attn_ref[:, g0 * dh:(g0 + group) * dh] = blk
    # TODO(synk): for very large head counts (many groups) switch these static
    # Python loops to lax.fori_loop over pl.ds slices to bound vreg live ranges.


def _mhsa_kernel_fused(x_ref, wqkv_ref, bqkv_ref, wo_ref, bo_ref, o_ref,
                       qkv_ref, attn_ref, *, head, group, approx_recip):
    """Single-tile path: the query tile covers the whole sequence."""
    d = wo_ref.shape[0]
    dh = d // head
    # One wide lane-dense (n, 3D) projection; result parked in VMEM scratch so
    # the head loop reads dh-wide slabs instead of keeping (n, 3D) values live.
    qkv = jnp.dot(x_ref[0], wqkv_ref[...], preferred_element_type=jnp.float32)
    qkv_ref[...] = (qkv + bqkv_ref[...]).astype(qkv_ref.dtype)

    _attend(qkv_ref, qkv_ref, attn_ref, head=head, dh=dh, group=group,
            k_off=d, v_off=2 * d, approx_recip=approx_recip)

    # Output projection from the contiguous attention slab.  Dropout(p=0) == id.
    out = jnp.dot(attn_ref[...], wo_ref[...],
                  preferred_element_type=jnp.float32) + bo_ref[...]
    o_ref[0] = out.astype(o_ref.dtype)


def _mhsa_kernel_tiled(xq_ref, xkv_ref, wqkv_ref, bqkv_ref, wo_ref, bo_ref,
                       o_ref, q_ref, kv_ref, attn_ref, *, head, group,
                       approx_recip):
    """Query-tiled path (nq > 1) with a per-batch K/V cache in VMEM scratch."""
    d = wo_ref.shape[0]
    dh = d // head

    # K/V projection for the whole sequence is done ONCE per batch element.
    # The query-tile grid axis is "arbitrary" (sequential), so the scratch
    # persists and stays valid for every later query tile of this batch elem.
    @pl.when(pl.program_id(1) == 0)
    def _():
        kv = jnp.dot(xkv_ref[0], wqkv_ref[:, d:],
                     preferred_element_type=jnp.float32) + bqkv_ref[:, d:]
        kv_ref[...] = kv.astype(kv_ref.dtype)

    # Query projection for this tile.  (Rows of a padded tail tile carry
    # undefined data; softmax is row-wise and Pallas masks their output
    # writes, so they are benign -- do not add masking-dependent math here.)
    q = jnp.dot(xq_ref[0], wqkv_ref[:, :d],
                preferred_element_type=jnp.float32) + bqkv_ref[:, :d]
    q_ref[...] = q.astype(q_ref.dtype)

    _attend(q_ref, kv_ref, attn_ref, head=head, dh=dh, group=group,
            k_off=0, v_off=d, approx_recip=approx_recip)

    out = jnp.dot(attn_ref[...], wo_ref[...],
                  preferred_element_type=jnp.float32) + bo_ref[...]
    o_ref[0] = out.astype(o_ref.dtype)


def mhsa_forward(x, params, *, head, matmul_dtype=jnp.bfloat16,
                 approx_recip=None, force_tq=None):
    b, n, d = x.shape
    assert d % head == 0, "feats must be divisible by head"
    wq, bq, wk, bk, wv, bv, wo, bo = params
    out_dtype = x.dtype
    inv_sqrt_d = 1.0 / (float(d) ** 0.5)   # module divides scores by sqrt(feats)
    if approx_recip is None:
        # Approximate (EUP) reciprocal only on the low-precision path; exact on f32.
        approx_recip = jnp.dtype(matmul_dtype) != jnp.dtype(jnp.float32)

    # Host-side packing (jit this wrapper so it fuses with the call):
    #  * Q|K|V fused into one (D, 3D) weight / (1, 3D) bias -> one wide MXU pass.
    #  * 1/sqrt(D) folded into the Q weights/bias (no per-tile scaling).
    #  * Matmul operands (x, W) cast to bf16 by default (MXU-native, halves
    #    weight/activation DMA); biases, accumulation and softmax stay f32.
    wqkv = jnp.concatenate([wq * inv_sqrt_d, wk, wv], axis=1).astype(matmul_dtype)
    bqkv = jnp.concatenate([bq * inv_sqrt_d, bk, bv], axis=1).astype(jnp.float32)
    wo_m = wo.astype(matmul_dtype)
    bo_f = bo.astype(jnp.float32)
    x_m = x.astype(matmul_dtype)

    mm_bytes = jnp.dtype(matmul_dtype).itemsize
    out_bytes = jnp.dtype(out_dtype).itemsize
    budget = _vmem_budget_bytes()
    tq = force_tq if force_tq is not None else _plan_tq(n, d, mm_bytes,
                                                        out_bytes, budget)
    tq = min(tq, n)
    fused = tq >= n
    dh = d // head
    group = _head_group_size(head, dh)

    cost = pl.CostEstimate(
        flops=int(2 * b * n * d * (3 * d)      # QKV projection
                  + 4 * b * n * n * d          # per-head QK^T + PV
                  + 2 * b * n * d * d),        # output projection
        transcendentals=int(b * head * n * n),
        bytes_accessed=int(x_m.size * mm_bytes + wqkv.size * mm_bytes
                           + wo_m.size * mm_bytes + bqkv.size * 4
                           + bo_f.size * 4 + b * n * d * out_bytes))

    cparams = pltpu.CompilerParams(
        dimension_semantics=("parallel",) if fused else ("parallel", "arbitrary"),
        vmem_limit_bytes=budget)

    if fused:
        kernel = functools.partial(_mhsa_kernel_fused, head=head, group=group,
                                   approx_recip=approx_recip)
        grid = (b,)
        in_specs = [
            pl.BlockSpec((1, n, d), lambda bi: (bi, 0, 0)),
            # Weights/biases: constant block index -> fetched once, not re-DMA'd.
            pl.BlockSpec((d, 3 * d), lambda bi: (0, 0)),
            pl.BlockSpec((1, 3 * d), lambda bi: (0, 0)),
            pl.BlockSpec((d, d), lambda bi: (0, 0)),
            pl.BlockSpec((1, d), lambda bi: (0, 0)),
        ]
        out_spec = pl.BlockSpec((1, n, d), lambda bi: (bi, 0, 0))
        scratch = [pltpu.VMEM((n, 3 * d), matmul_dtype),   # fused Q|K|V slab
                   pltpu.VMEM((n, d), matmul_dtype)]       # attention slab
        operands = (x_m, wqkv, bqkv, wo_m, bo_f)
    else:
        kernel = functools.partial(_mhsa_kernel_tiled, head=head, group=group,
                                   approx_recip=approx_recip)
        grid = (b, pl.cdiv(n, tq))
        in_specs = [
            pl.BlockSpec((1, tq, d), lambda bi, qi: (bi, qi, 0)),   # query tile
            pl.BlockSpec((1, n, d), lambda bi, qi: (bi, 0, 0)),     # full seq (K/V)
            pl.BlockSpec((d, 3 * d), lambda bi, qi: (0, 0)),
            pl.BlockSpec((1, 3 * d), lambda bi, qi: (0, 0)),
            pl.BlockSpec((d, d), lambda bi, qi: (0, 0)),
            pl.BlockSpec((1, d), lambda bi, qi: (0, 0)),
        ]
        out_spec = pl.BlockSpec((1, tq, d), lambda bi, qi: (bi, qi, 0))
        scratch = [pltpu.VMEM((tq, d), matmul_dtype),      # Q tile
                   pltpu.VMEM((n, 2 * d), matmul_dtype),   # per-batch K|V cache
                   pltpu.VMEM((tq, d), matmul_dtype)]      # attention slab
        operands = (x_m, x_m, wqkv, bqkv, wo_m, bo_f)

    return pl.pallas_call(
        kernel,
        out_shape=jax.ShapeDtypeStruct((b, n, d), out_dtype),
        grid=grid,
        in_specs=in_specs,
        out_specs=out_spec,
        scratch_shapes=scratch,
        compiler_params=cparams,
        cost_estimate=cost,
    )(*operands)


def reference(x, params, *, head):
    # Pure-JAX reference mirroring the PyTorch forward exactly (f32).
    wq, bq, wk, bk, wv, bv, wo, bo = params
    b, n, d = x.shape
    dh = d // head
    q = x @ wq + bq
    k = x @ wk + bk
    v = x @ wv + bv
    split = lambda t: t.reshape(b, n, head, dh).transpose(0, 2, 1, 3)  # b h n d
    qh, kh, vh = split(q), split(k), split(v)
    s = jnp.einsum('bhnd,bhmd->bhnm', qh, kh) / (float(d) ** 0.5)
    p = jax.nn.softmax(s, axis=-1)
    attn = jnp.einsum('bhnm,bhmd->bnhd', p, vh).reshape(b, n, d)
    return attn @ wo + bo


def init_params(key, feats):
    # Deterministic init mimicking nn.Linear default: U(-1/sqrt(in), 1/sqrt(in)).
    bound = 1.0 / (feats ** 0.5)
    keys = jax.random.split(key, 8)
    params = []
    for i in range(4):  # q, k, v, o
        w = jax.random.uniform(keys[2 * i], (feats, feats), jnp.float32,
                               -bound, bound)
        bvec = jax.random.uniform(keys[2 * i + 1], (1, feats), jnp.float32,
                                  -bound, bound)
        params.extend([w, bvec])
    return tuple(params)


if __name__ == "__main__":
    B, N, FEATS, HEAD = 2, 8, 32, 8

    root = jax.random.PRNGKey(0)
    kx, kp, kx2 = jax.random.split(root, 3)
    x = jax.random.normal(kx, (B, N, FEATS), dtype=jnp.float32)
    params = init_params(kp, FEATS)
    ref = reference(x, params, head=HEAD)

    # 1) Fused single-tile path, full-f32 matmuls + exact softmax reciprocal.
    fwd_f32 = jax.jit(functools.partial(mhsa_forward, head=HEAD,
                                        matmul_dtype=jnp.float32))
    out_f32 = jax.block_until_ready(fwd_f32(x, params))
    assert out_f32.shape == (B, N, FEATS)
    assert jnp.allclose(out_f32, ref, atol=5e-3, rtol=5e-3), \
        "f32 fused kernel mismatch vs JAX reference"

    # 2) Default bf16 MXU-operand path (f32 accumulation / softmax math).
    fwd_bf16 = jax.jit(functools.partial(mhsa_forward, head=HEAD))
    out_bf16 = jax.block_until_ready(fwd_bf16(x, params))
    assert out_bf16.shape == (B, N, FEATS)
    assert jnp.allclose(out_bf16, ref, atol=5e-2, rtol=5e-2), \
        "bf16 fused kernel mismatch vs JAX reference"

    # 3) Tiled path with the per-batch K/V VMEM cache (longer sequence, forced
    #    small query tile so nq > 1; f32 + exact reciprocal for a tight check).
    N2 = 32
    x2 = jax.random.normal(kx2, (B, N2, FEATS), dtype=jnp.float32)
    ref2 = reference(x2, params, head=HEAD)
    fwd_tiled = jax.jit(functools.partial(mhsa_forward, head=HEAD,
                                          matmul_dtype=jnp.float32,
                                          force_tq=16))
    out_tiled = jax.block_until_ready(fwd_tiled(x2, params))
    assert out_tiled.shape == (B, N2, FEATS)
    assert jnp.allclose(out_tiled, ref2, atol=5e-3, rtol=5e-3), \
        "tiled (K/V-cached) kernel mismatch vs JAX reference"

    print("KERNEL_OK")
</pallas_src>

<mosaic_0001>
module attributes {stable_mosaic.version = 11 : i64} {
  func.func @_mhsa_kernel_fused(%arg0: i32, %arg1: memref<1x8x32xf32, #tpu.memory_space<vmem>>, %arg2: memref<32x96xf32, #tpu.memory_space<vmem>>, %arg3: memref<1x96xf32, #tpu.memory_space<vmem>>, %arg4: memref<32x32xf32, #tpu.memory_space<vmem>>, %arg5: memref<1x32xf32, #tpu.memory_space<vmem>>, %arg6: memref<1x8x32xf32, #tpu.memory_space<vmem>>, %arg7: memref<8x96xf32, #tpu.memory_space<vmem>>, %arg8: memref<8x32xf32, #tpu.memory_space<vmem>>) attributes {dimension_semantics = [#tpu.dimension_semantics<parallel>], iteration_bounds = array<i64: 2>, scalar_prefetch = 0 : i64, scratch_operands = 2 : i64, tpu.core_type = #tpu.core_type<tc>, window_params = [{transform_indices = @transform_0, window_bounds = array<i64: 1, 8, 32>}, {pipeline_mode = #tpu.pipeline_mode<synchronous>, transform_indices = @transform_1, window_bounds = array<i64: 32, 96>}, {pipeline_mode = #tpu.pipeline_mode<synchronous>, transform_indices = @transform_2, window_bounds = array<i64: 1, 96>}, {pipeline_mode = #tpu.pipeline_mode<synchronous>, transform_indices = @transform_3, window_bounds = array<i64: 32, 32>}, {pipeline_mode = #tpu.pipeline_mode<synchronous>, transform_indices = @transform_4, window_bounds = array<i64: 1, 32>}, {transform_indices = @transform_5, window_bounds = array<i64: 1, 8, 32>}]} {
    %c0 = arith.constant 0 : index
    %c0_0 = arith.constant 0 : index
    %c0_1 = arith.constant 0 : index
    %0 = vector.load %arg1[%c0, %c0_0, %c0_1] : memref<1x8x32xf32, #tpu.memory_space<vmem>>, vector<1x8x32xf32>
    %1 = vector.shape_cast %0 : vector<1x8x32xf32> to vector<8x32xf32>
    %c0_2 = arith.constant 0 : index
    %c0_3 = arith.constant 0 : index
    %2 = vector.load %arg2[%c0_2, %c0_3] : memref<32x96xf32, #tpu.memory_space<vmem>>, vector<32x96xf32>
    %cst = arith.constant dense<0.000000e+00> : vector<8x96xf32>
    %3 = tpu.matmul %1, %2, %cst {dimension_numbers = #tpu.dot_dimension_numbers<[1], [0], [0], [1], [0, 0, 1, 1], [], []>} : vector<8x32xf32>, vector<32x96xf32>, vector<8x96xf32> -> vector<8x96xf32>
    %c0_4 = arith.constant 0 : index
    %c0_5 = arith.constant 0 : index
    %4 = vector.load %arg3[%c0_4, %c0_5] : memref<1x96xf32, #tpu.memory_space<vmem>>, vector<1x96xf32>
    %5 = vector.broadcast %4 : vector<1x96xf32> to vector<8x96xf32>
    %6 = arith.addf %3, %5 : vector<8x96xf32>
    %c0_6 = arith.constant 0 : index
    %c0_7 = arith.constant 0 : index
    %7 = vector.load %arg7[%c0_6, %c0_7] : memref<8x96xf32, #tpu.memory_space<vmem>>, vector<8x96xf32>
    tpu.vector_store %arg7[%c0_6, %c0_7], %6 {strides = array<i32>} : memref<8x96xf32, #tpu.memory_space<vmem>>, vector<8x96xf32>,
    %c0_8 = arith.constant 0 : index
    %c0_9 = arith.constant 0 : index
    %8 = vector.load %arg7[%c0_8, %c0_9] : memref<8x96xf32, #tpu.memory_space<vmem>>, vector<8x4xf32>
    %c0_10 = arith.constant 0 : index
    %c32 = arith.constant 32 : index
    %9 = vector.load %arg7[%c0_10, %c32] : memref<8x96xf32, #tpu.memory_space<vmem>>, vector<8x4xf32>
    %c0_11 = arith.constant 0 : index
    %c64 = arith.constant 64 : index
    %10 = vector.load %arg7[%c0_11, %c64] : memref<8x96xf32, #tpu.memory_space<vmem>>, vector<8x4xf32>
    %cst_12 = arith.constant dense<0.000000e+00> : vector<8x8xf32>
    %11 = tpu.matmul %8, %9, %cst_12 {dimension_numbers = #tpu.dot_dimension_numbers<[1], [1], [0], [0], [0, 0, 1, 0], [], []>} : vector<8x4xf32>, vector<8x4xf32>, vector<8x8xf32> -> vector<8x8xf32>
    %cst_13 = arith.constant dense<0xFF800000> : vector<8xf32>
    %12 = vector.multi_reduction <maximumf>, %11, %cst_13 [1] : vector<8x8xf32> to vector<8xf32>
    %13 = vector.shape_cast %12 : vector<8xf32> to vector<8x1xf32>
    %14 = vector.broadcast %13 : vector<8x1xf32> to vector<8x8xf32>
    %15 = arith.subf %11, %14 : vector<8x8xf32>
    %16 = math.exp %15 : vector<8x8xf32>
    %cst_14 = arith.constant dense<0.000000e+00> : vector<8xf32>
    %17 = vector.multi_reduction <add>, %16, %cst_14 [1] : vector<8x8xf32> to vector<8xf32>
    %18 = vector.shape_cast %17 : vector<8xf32> to vector<8x1xf32>
    %cst_15 = arith.constant dense<0.000000e+00> : vector<8x4xf32>
    %19 = tpu.matmul %16, %10, %cst_15 {dimension_numbers = #tpu.dot_dimension_numbers<[1], [0], [0], [1], [0, 0, 1, 1], [], []>} : vector<8x8xf32>, vector<8x4xf32>, vector<8x4xf32> -> vector<8x4xf32>
    %20 = tpu.reciprocal %18 : vector<8x1xf32> -> vector<8x1xf32>
    %21 = vector.broadcast %20 : vector<8x1xf32> to vector<8x4xf32>
    %22 = arith.mulf %19, %21 : vector<8x4xf32>
    %c0_16 = arith.constant 0 : index
    %c4 = arith.constant 4 : index
    %23 = vector.load %arg7[%c0_16, %c4] : memref<8x96xf32, #tpu.memory_space<vmem>>, vector<8x4xf32>
    %c0_17 = arith.constant 0 : index
    %c36 = arith.constant 36 : index
    %24 = vector.load %arg7[%c0_17, %c36] : memref<8x96xf32, #tpu.memory_space<vmem>>, vector<8x4xf32>
    %c0_18 = arith.constant 0 : index
    %c68 = arith.constant 68 : index
    %25 = vector.load %arg7[%c0_18, %c68] : memref<8x96xf32, #tpu.memory_space<vmem>>, vector<8x4xf32>
    %cst_19 = arith.constant dense<0.000000e+00> : vector<8x8xf32>
    %26 = tpu.matmul %23, %24, %cst_19 {dimension_numbers = #tpu.dot_dimension_numbers<[1], [1], [0], [0], [0, 0, 1, 0], [], []>} : vector<8x4xf32>, vector<8x4xf32>, vector<8x8xf32> -> vector<8x8xf32>
    %cst_20 = arith.constant dense<0xFF800000> : vector<8xf32>
    %27 = vector.multi_reduction <maximumf>, %26, %cst_20 [1] : vector<8x8xf32> to vector<8xf32>
    %28 = vector.shape_cast %27 : vector<8xf32> to vector<8x1xf32>
    %29 = vector.broadcast %28 : vector<8x1xf32> to vector<8x8xf32>
    %30 = arith.subf %26, %29 : vector<8x8xf32>
    %31 = math.exp %30 : vector<8x8xf32>
    %cst_21 = arith.constant dense<0.000000e+00> : vector<8xf32>
    %32 = vector.multi_reduction <add>, %31, %cst_21 [1] : vector<8x8xf32> to vector<8xf32>
    %33 = vector.shape_cast %32 : vector<8xf32> to vector<8x1xf32>
    %cst_22 = arith.constant dense<0.000000e+00> : vector<8x4xf32>
    %34 = tpu.matmul %31, %25, %cst_22 {dimension_numbers = #tpu.dot_dimension_numbers<[1], [0], [0], [1], [0, 0, 1, 1], [], []>} : vector<8x8xf32>, vector<8x4xf32>, vector<8x4xf32> -> vector<8x4xf32>
    %35 = tpu.reciprocal %33 : vector<8x1xf32> -> vector<8x1xf32>
    %36 = vector.broadcast %35 : vector<8x1xf32> to vector<8x4xf32>
    %37 = arith.mulf %34, %36 : vector<8x4xf32>
    %c0_23 = arith.constant 0 : index
    %c8 = arith.constant 8 : index
    %38 = vector.load %arg7[%c0_23, %c8] : memref<8x96xf32, #tpu.memory_space<vmem>>, vector<8x4xf32>
    %c0_24 = arith.constant 0 : index
    %c40 = arith.constant 40 : index
    %39 = vector.load %arg7[%c0_24, %c40] : memref<8x96xf32, #tpu.memory_space<vmem>>, vector<8x4xf32>
    %c0_25 = arith.constant 0 : index
    %c72 = arith.constant 72 : index
    %40 = vector.load %arg7[%c0_25, %c72] : memref<8x96xf32, #tpu.memory_space<vmem>>, vector<8x4xf32>
    %cst_26 = arith.constant dense<0.000000e+00> : vector<8x8xf32>
    %41 = tpu.matmul %38, %39, %cst_26 {dimension_numbers = #tpu.dot_dimension_numbers<[1], [1], [0], [0], [0, 0, 1, 0], [], []>} : vector<8x4xf32>, vector<8x4xf32>, vector<8x8xf32> -> vector<8x8xf32>
    %cst_27 = arith.constant dense<0xFF800000> : vector<8xf32>
    %42 = vector.multi_reduction <maximumf>, %41, %cst_27 [1] : vector<8x8xf32> to vector<8xf32>
    %43 = vector.shape_cast %42 : vector<8xf32> to vector<8x1xf32>
    %44 = vector.broadcast %43 : vector<8x1xf32> to vector<8x8xf32>
    %45 = arith.subf %41, %44 : vector<8x8xf32>
    %46 = math.exp %45 : vector<8x8xf32>
    %cst_28 = arith.constant dense<0.000000e+00> : vector<8xf32>
    %47 = vector.multi_reduction <add>, %46, %cst_28 [1] : vector<8x8xf32> to vector<8xf32>
    %48 = vector.shape_cast %47 : vector<8xf32> to vector<8x1xf32>
    %cst_29 = arith.constant dense<0.000000e+00> : vector<8x4xf32>
    %49 = tpu.matmul %46, %40, %cst_29 {dimension_numbers = #tpu.dot_dimension_numbers<[1], [0], [0], [1], [0, 0, 1, 1], [], []>} : vector<8x8xf32>, vector<8x4xf32>, vector<8x4xf32> -> vector<8x4xf32>
    %50 = tpu.reciprocal %48 : vector<8x1xf32> -> vector<8x1xf32>
    %51 = vector.broadcast %50 : vector<8x1xf32> to vector<8x4xf32>
    %52 = arith.mulf %49, %51 : vector<8x4xf32>
    %c0_30 = arith.constant 0 : index
    %c12 = arith.constant 12 : index
    %53 = vector.load %arg7[%c0_30, %c12] : memref<8x96xf32, #tpu.memory_space<vmem>>, vector<8x4xf32>
    %c0_31 = arith.constant 0 : index
    %c44 = arith.constant 44 : index
    %54 = vector.load %arg7[%c0_31, %c44] : memref<8x96xf32, #tpu.memory_space<vmem>>, vector<8x4xf32>
    %c0_32 = arith.constant 0 : index
    %c76 = arith.constant 76 : index
    %55 = vector.load %arg7[%c0_32, %c76] : memref<8x96xf32, #tpu.memory_space<vmem>>, vector<8x4xf32>
    %cst_33 = arith.constant dense<0.000000e+00> : vector<8x8xf32>
    %56 = tpu.matmul %53, %54, %cst_33 {dimension_numbers = #tpu.dot_dimension_numbers<[1], [1], [0], [0], [0, 0, 1, 0], [], []>} : vector<8x4xf32>, vector<8x4xf32>, vector<8x8xf32> -> vector<8x8xf32>
    %cst_34 = arith.constant dense<0xFF800000> : vector<8xf32>
    %57 = vector.multi_reduction <maximumf>, %56, %cst_34 [1] : vector<8x8xf32> to vector<8xf32>
    %58 = vector.shape_cast %57 : vector<8xf32> to vector<8x1xf32>
    %59 = vector.broadcast %58 : vector<8x1xf32> to vector<8x8xf32>
    %60 = arith.subf %56, %59 : vector<8x8xf32>
    %61 = math.exp %60 : vector<8x8xf32>
    %cst_35 = arith.constant dense<0.000000e+00> : vector<8xf32>
    %62 = vector.multi_reduction <add>, %61, %cst_35 [1] : vector<8x8xf32> to vector<8xf32>
    %63 = vector.shape_cast %62 : vector<8xf32> to vector<8x1xf32>
    %cst_36 = arith.constant dense<0.000000e+00> : vector<8x4xf32>
    %64 = tpu.matmul %61, %55, %cst_36 {dimension_numbers = #tpu.dot_dimension_numbers<[1], [0], [0], [1], [0, 0, 1, 1], [], []>} : vector<8x8xf32>, vector<8x4xf32>, vector<8x4xf32> -> vector<8x4xf32>
    %65 = tpu.reciprocal %63 : vector<8x1xf32> -> vector<8x1xf32>
    %66 = vector.broadcast %65 : vector<8x1xf32> to vector<8x4xf32>
    %67 = arith.mulf %64, %66 : vector<8x4xf32>
    %c0_37 = arith.constant 0 : index
    %c16 = arith.constant 16 : index
    %68 = vector.load %arg7[%c0_37, %c16] : memref<8x96xf32, #tpu.memory_space<vmem>>, vector<8x4xf32>
    %c0_38 = arith.constant 0 : index
    %c48 = arith.constant 48 : index
    %69 = vector.load %arg7[%c0_38, %c48] : memref<8x96xf32, #tpu.memory_space<vmem>>, vector<8x4xf32>
    %c0_39 = arith.constant 0 : index
    %c80 = arith.constant 80 : index
    %70 = vector.load %arg7[%c0_39, %c80] : memref<8x96xf32, #tpu.memory_space<vmem>>, vector<8x4xf32>
    %cst_40 = arith.constant dense<0.000000e+00> : vector<8x8xf32>
    %71 = tpu.matmul %68, %69, %cst_40 {dimension_numbers = #tpu.dot_dimension_numbers<[1], [1], [0], [0], [0, 0, 1, 0], [], []>} : vector<8x4xf32>, vector<8x4xf32>, vector<8x8xf32> -> vector<8x8xf32>
    %cst_41 = arith.constant dense<0xFF800000> : vector<8xf32>
    %72 = vector.multi_reduction <maximumf>, %71, %cst_41 [1] : vector<8x8xf32> to vector<8xf32>
    %73 = vector.shape_cast %72 : vector<8xf32> to vector<8x1xf32>
    %74 = vector.broadcast %73 : vector<8x1xf32> to vector<8x8xf32>
    %75 = arith.subf %71, %74 : vector<8x8xf32>
    %76 = math.exp %75 : vector<8x8xf32>
    %cst_42 = arith.constant dense<0.000000e+00> : vector<8xf32>
    %77 = vector.multi_reduction <add>, %76, %cst_42 [1] : vector<8x8xf32> to vector<8xf32>
    %78 = vector.shape_cast %77 : vector<8xf32> to vector<8x1xf32>
    %cst_43 = arith.constant dense<0.000000e+00> : vector<8x4xf32>
    %79 = tpu.matmul %76, %70, %cst_43 {dimension_numbers = #tpu.dot_dimension_numbers<[1], [0], [0], [1], [0, 0, 1, 1], [], []>} : vector<8x8xf32>, vector<8x4xf32>, vector<8x4xf32> -> vector<8x4xf32>
    %80 = tpu.reciprocal %78 : vector<8x1xf32> -> vector<8x1xf32>
    %81 = vector.broadcast %80 : vector<8x1xf32> to vector<8x4xf32>
    %82 = arith.mulf %79, %81 : vector<8x4xf32>
    %c0_44 = arith.constant 0 : index
    %c20 = arith.constant 20 : index
    %83 = vector.load %arg7[%c0_44, %c20] : memref<8x96xf32, #tpu.memory_space<vmem>>, vector<8x4xf32>
    %c0_45 = arith.constant 0 : index
    %c52 = arith.constant 52 : index
    %84 = vector.load %arg7[%c0_45, %c52] : memref<8x96xf32, #tpu.memory_space<vmem>>, vector<8x4xf32>
    %c0_46 = arith.constant 0 : index
    %c84 = arith.constant 84 : index
    %85 = vector.load %arg7[%c0_46, %c84] : memref<8x96xf32, #tpu.memory_space<vmem>>, vector<8x4xf32>
    %cst_47 = arith.constant dense<0.000000e+00> : vector<8x8xf32>
    %86 = tpu.matmul %83, %84, %cst_47 {dimension_numbers = #tpu.dot_dimension_numbers<[1], [1], [0], [0], [0, 0, 1, 0], [], []>} : vector<8x4xf32>, vector<8x4xf32>, vector<8x8xf32> -> vector<8x8xf32>
    %cst_48 = arith.constant dense<0xFF800000> : vector<8xf32>
    %87 = vector.multi_reduction <maximumf>, %86, %cst_48 [1] : vector<8x8xf32> to vector<8xf32>
    %88 = vector.shape_cast %87 : vector<8xf32> to vector<8x1xf32>
    %89 = vector.broadcast %88 : vector<8x1xf32> to vector<8x8xf32>
    %90 = arith.subf %86, %89 : vector<8x8xf32>
    %91 = math.exp %90 : vector<8x8xf32>
    %cst_49 = arith.constant dense<0.000000e+00> : vector<8xf32>
    %92 = vector.multi_reduction <add>, %91, %cst_49 [1] : vector<8x8xf32> to vector<8xf32>
    %93 = vector.shape_cast %92 : vector<8xf32> to vector<8x1xf32>
    %cst_50 = arith.constant dense<0.000000e+00> : vector<8x4xf32>
    %94 = tpu.matmul %91, %85, %cst_50 {dimension_numbers = #tpu.dot_dimension_numbers<[1], [0], [0], [1], [0, 0, 1, 1], [], []>} : vector<8x8xf32>, vector<8x4xf32>, vector<8x4xf32> -> vector<8x4xf32>
    %95 = tpu.reciprocal %93 : vector<8x1xf32> -> vector<8x1xf32>
    %96 = vector.broadcast %95 : vector<8x1xf32> to vector<8x4xf32>
    %97 = arith.mulf %94, %96 : vector<8x4xf32>
    %c0_51 = arith.constant 0 : index
    %c24 = arith.constant 24 : index
    %98 = vector.load %arg7[%c0_51, %c24] : memref<8x96xf32, #tpu.memory_space<vmem>>, vector<8x4xf32>
    %c0_52 = arith.constant 0 : index
    %c56 = arith.constant 56 : index
    %99 = vector.load %arg7[%c0_52, %c56] : memref<8x96xf32, #tpu.memory_space<vmem>>, vector<8x4xf32>
    %c0_53 = arith.constant 0 : index
    %c88 = arith.constant 88 : index
    %100 = vector.load %arg7[%c0_53, %c88] : memref<8x96xf32, #tpu.memory_space<vmem>>, vector<8x4xf32>
    %cst_54 = arith.constant dense<0.000000e+00> : vector<8x8xf32>
    %101 = tpu.matmul %98, %99, %cst_54 {dimension_numbers = #tpu.dot_dimension_numbers<[1], [1], [0], [0], [0, 0, 1, 0], [], []>} : vector<8x4xf32>, vector<8x4xf32>, vector<8x8xf32> -> vector<8x8xf32>
    %cst_55 = arith.constant dense<0xFF800000> : vector<8xf32>
    %102 = vector.multi_reduction <maximumf>, %101, %cst_55 [1] : vector<8x8xf32> to vector<8xf32>
    %103 = vector.shape_cast %102 : vector<8xf32> to vector<8x1xf32>
    %104 = vector.broadcast %103 : vector<8x1xf32> to vector<8x8xf32>
    %105 = arith.subf %101, %104 : vector<8x8xf32>
    %106 = math.exp %105 : vector<8x8xf32>
    %cst_56 = arith.constant dense<0.000000e+00> : vector<8xf32>
    %107 = vector.multi_reduction <add>, %106, %cst_56 [1] : vector<8x8xf32> to vector<8xf32>
    %108 = vector.shape_cast %107 : vector<8xf32> to vector<8x1xf32>
    %cst_57 = arith.constant dense<0.000000e+00> : vector<8x4xf32>
    %109 = tpu.matmul %106, %100, %cst_57 {dimension_numbers = #tpu.dot_dimension_numbers<[1], [0], [0], [1], [0, 0, 1, 1], [], []>} : vector<8x8xf32>, vector<8x4xf32>, vector<8x4xf32> -> vector<8x4xf32>
    %110 = tpu.reciprocal %108 : vector<8x1xf32> -> vector<8x1xf32>
    %111 = vector.broadcast %110 : vector<8x1xf32> to vector<8x4xf32>
    %112 = arith.mulf %109, %111 : vector<8x4xf32>
    %c0_58 = arith.constant 0 : index
    %c28 = arith.constant 28 : index
    %113 = vector.load %arg7[%c0_58, %c28] : memref<8x96xf32, #tpu.memory_space<vmem>>, vector<8x4xf32>
    %c0_59 = arith.constant 0 : index
    %c60 = arith.constant 60 : index
    %114 = vector.load %arg7[%c0_59, %c60] : memref<8x96xf32, #tpu.memory_space<vmem>>, vector<8x4xf32>
    %c0_60 = arith.constant 0 : index
    %c92 = arith.constant 92 : index
    %115 = vector.load %arg7[%c0_60, %c92] : memref<8x96xf32, #tpu.memory_space<vmem>>, vector<8x4xf32>
    %cst_61 = arith.constant dense<0.000000e+00> : vector<8x8xf32>
    %116 = tpu.matmul %113, %114, %cst_61 {dimension_numbers = #tpu.dot_dimension_numbers<[1], [1], [0], [0], [0, 0, 1, 0], [], []>} : vector<8x4xf32>, vector<8x4xf32>, vector<8x8xf32> -> vector<8x8xf32>
    %cst_62 = arith.constant dense<0xFF800000> : vector<8xf32>
    %117 = vector.multi_reduction <maximumf>, %116, %cst_62 [1] : vector<8x8xf32> to vector<8xf32>
    %118 = vector.shape_cast %117 : vector<8xf32> to vector<8x1xf32>
    %119 = vector.broadcast %118 : vector<8x1xf32> to vector<8x8xf32>
    %120 = arith.subf %116, %119 : vector<8x8xf32>
    %121 = math.exp %120 : vector<8x8xf32>
    %cst_63 = arith.constant dense<0.000000e+00> : vector<8xf32>
    %122 = vector.multi_reduction <add>, %121, %cst_63 [1] : vector<8x8xf32> to vector<8xf32>
    %123 = vector.shape_cast %122 : vector<8xf32> to vector<8x1xf32>
    %cst_64 = arith.constant dense<0.000000e+00> : vector<8x4xf32>
    %124 = tpu.matmul %121, %115, %cst_64 {dimension_numbers = #tpu.dot_dimension_numbers<[1], [0], [0], [1], [0, 0, 1, 1], [], []>} : vector<8x8xf32>, vector<8x4xf32>, vector<8x4xf32> -> vector<8x4xf32>
    %125 = tpu.reciprocal %123 : vector<8x1xf32> -> vector<8x1xf32>
    %126 = vector.broadcast %125 : vector<8x1xf32> to vector<8x4xf32>
    %127 = arith.mulf %124, %126 : vector<8x4xf32>
    %128 = tpu.concatenate %22, %37, %52, %67, %82, %97, %112, %127 in 1 : vector<8x4xf32>, vector<8x4xf32>, vector<8x4xf32>, vector<8x4xf32>, vector<8x4xf32>, vector<8x4xf32>, vector<8x4xf32>, vector<8x4xf32> -> vector<8x32xf32>
    %c0_65 = arith.constant 0 : index
    %c0_66 = arith.constant 0 : index
    %129 = vector.load %arg8[%c0_65, %c0_66] : memref<8x32xf32, #tpu.memory_space<vmem>>, vector<8x32xf32>
    tpu.vector_store %arg8[%c0_65, %c0_66], %128 {strides = array<i32>} : memref<8x32xf32, #tpu.memory_space<vmem>>, vector<8x32xf32>,
    %c0_67 = arith.constant 0 : index
    %c0_68 = arith.constant 0 : index
    %130 = vector.load %arg8[%c0_67, %c0_68] : memref<8x32xf32, #tpu.memory_space<vmem>>, vector<8x32xf32>
    %c0_69 = arith.constant 0 : index
    %c0_70 = arith.constant 0 : index
    %131 = vector.load %arg4[%c0_69, %c0_70] : memref<32x32xf32, #tpu.memory_space<vmem>>, vector<32x32xf32>
    %cst_71 = arith.constant dense<0.000000e+00> : vector<8x32xf32>
    %132 = tpu.matmul %130, %131, %cst_71 {dimension_numbers = #tpu.dot_dimension_numbers<[1], [0], [0], [1], [0, 0, 1, 1], [], []>} : vector<8x32xf32>, vector<32x32xf32>, vector<8x32xf32> -> vector<8x32xf32>
    %c0_72 = arith.constant 0 : index
    %c0_73 = arith.constant 0 : index
    %133 = vector.load %arg5[%c0_72, %c0_73] : memref<1x32xf32, #tpu.memory_space<vmem>>, vector<1x32xf32>
    %134 = vector.broadcast %133 : vector<1x32xf32> to vector<8x32xf32>
    %135 = arith.addf %132, %134 : vector<8x32xf32>
    %c0_74 = arith.constant 0 : index
    %c0_75 = arith.constant 0 : index
    %c0_76 = arith.constant 0 : index
    %136 = vector.load %arg6[%c0_74, %c0_75, %c0_76] : memref<1x8x32xf32, #tpu.memory_space<vmem>>, vector<1x8x32xf32>
    %137 = vector.shape_cast %136 : vector<1x8x32xf32> to vector<8x32xf32>
    %138 = vector.shape_cast %135 : vector<8x32xf32> to vector<1x8x32xf32>
    tpu.vector_store %arg6[%c0_74, %c0_75, %c0_76], %138 {strides = array<i32>} : memref<1x8x32xf32, #tpu.memory_space<vmem>>, vector<1x8x32xf32>,
    return
  }
  func.func @transform_0(%arg0: i32) -> (i32, i32, i32) {
    %c0_i32 = arith.constant 0 : i32
    %c0_i32_0 = arith.constant 0 : i32
    %c0_i32_1 = arith.constant 0 : i32
    return %arg0, %c0_i32, %c0_i32_0 : i32, i32, i32
  }
  func.func @transform_1(%arg0: i32) -> (i32, i32) {
    %c0_i32 = arith.constant 0 : i32
    %c0_i32_0 = arith.constant 0 : i32
    %c0_i32_1 = arith.constant 0 : i32
    return %c0_i32, %c0_i32_0 : i32, i32
  }
  func.func @transform_2(%arg0: i32) -> (i32, i32) {
    %c0_i32 = arith.constant 0 : i32
    %c0_i32_0 = arith.constant 0 : i32
    %c0_i32_1 = arith.constant 0 : i32
    return %c0_i32, %c0_i32_0 : i32, i32
  }
  func.func @transform_3(%arg0: i32) -> (i32, i32) {
    %c0_i32 = arith.constant 0 : i32
    %c0_i32_0 = arith.constant 0 : i32
    %c0_i32_1 = arith.constant 0 : i32
    return %c0_i32, %c0_i32_0 : i32, i32
  }
  func.func @transform_4(%arg0: i32) -> (i32, i32) {
    %c0_i32 = arith.constant 0 : i32
    %c0_i32_0 = arith.constant 0 : i32
    %c0_i32_1 = arith.constant 0 : i32
    return %c0_i32, %c0_i32_0 : i32, i32
  }
  func.func @transform_5(%arg0: i32) -> (i32, i32, i32) {
    %c0_i32 = arith.constant 0 : i32
    %c0_i32_0 = arith.constant 0 : i32
    %c0_i32_1 = arith.constant 0 : i32
    return %arg0, %c0_i32, %c0_i32_0 : i32, i32, i32
  }
}

</mosaic_0001>

<llo_original>
// kernel: mhsa_forward.1
$region0: #{mhsa_forward.1}
  #allocation0 [shape = 'u32[]', space=smem, size = 0x4, offset = 0x4, fixed_abs, tag = 'smem constant byte address 0x4 - core index']
  #allocation1 [shape = 'u32[144,128]{1,0:T(1,128)}', space=vmem, size = 0x12000, scoped, tag = 'internal scratch']
  #allocation2 [shape = 'f32[8,96]{1,0:T(8,128)}', space=vmem, size = 0x1000, scoped, tag = 'scratch operand']
  #allocation3 [shape = 'f32[8,32]{1,0:T(8,128)}', space=vmem, size = 0x1000, scoped, tag = 'scratch operand']
  %s0 = inlined_call_operand.vmem [shape: f32[2,8,32], index: 0, kind: input, shape index: {}]
  %s1 = inlined_call_operand.vmem [shape: f32[32,96], index: 1, kind: input, shape index: {}]
  %s2 = inlined_call_operand.vmem [shape: f32[1,96], index: 2, kind: input, shape index: {}]
  %s3 = inlined_call_operand.vmem [shape: f32[32,32], index: 3, kind: input, shape index: {}]
  %s4 = inlined_call_operand.vmem [shape: f32[1,32], index: 4, kind: input, shape index: {}]
  %s5 = inlined_call_operand.hbm [shape: f32[2,8,32], index: 5, kind: output, shape index: {}]
  %s6 = sld [smem:[#allocation0]]
  $region53: #{mhsa_forward.1} parent=0
    _
  %s8 = ssub.s32 1, %s6
  %s9 = scalar_select 0, %s8, %s6
  $region1: #{mhsa_forward.1} parent=0
    #allocation4 [shape = 'u8[8192]{0}', space=vmem, size = 0x2000, scoped, tag = 'output window, operand 0']
    #allocation5 [shape = 's32[2]{0}', space=sflag, size = 0x8, scoped, tag = 'scoped memory for mhsa_forward.1']
    %10 = vsyncpa [#allocation5], 0
    %s11 = scalar_lea.sflag [#allocation5], 1
    %12 = vsyncpa %s11, 0
    loop: start=0, step=1, limit=4
    $region2: #{mhsa_forward.1} parent=1 // loop_pre_header
      _
    $region3: #{mhsa_forward.1} parent=1 // loop_header
      %s14 = sphi 0, %s18
      %p15 = scmp.ge.s32.totalorder %s14, 4
      %s24 = sphi 0, %s26
      %s27 = sphi 0, %s24
      %s28 = sphi 0, %s27
      %s44 = sphi 0, %s28
      %s48 = sphi 0, %s48
      %s50 = sphi 0, %s48
      %s51 = sphi 0, %s50
      %s65 = sphi 0, %s51
      %s69 = sphi 0, %s69
      %s71 = sphi 0, %s69
      %s72 = sphi 0, %s71
      %s86 = sphi 0, %s72
      %s90 = sphi 0, %s90
      %s92 = sphi 0, %s90
      %s93 = sphi 0, %s92
      %s107 = sphi 0, %s93
      %s111 = sphi 0, %s111
      %s113 = sphi 0, %s111
      %s114 = sphi 0, %s113
      %s128 = sphi 0, %s114
      %s134 = sphi 0, %s136
      %s137 = sphi 0, %s134
      %s138 = sphi 0, %s137
      %s154 = sphi 0, %s138
    $region4: #{mhsa_forward.1} parent=1 // loop_header_branch
      %17 = sbr.rel (%p15) target = $region8
    $region5: #{mhsa_forward.1} parent=1 // loop_body
      %s19 = ssub.s32 %s14, 1
      %s20 = ssub.s32 %s14, 2
      %s21 = sadd.s32 %s14, 1
      %s22 = ssub.s32 %s14, %s21
      %p23 = scmp.eq.s32.totalorder %s22, 0
      %s25 = sadd.s32 %s24, 1
      %s26 = scalar_select %p23, %s24, %s25
      %p29 = pneg %p23
      %p30 = scmp.eq.s32.totalorder %s14, 1
      %p31 = por %p29, %p30
      %p32 = scmp.ne.s32.totalorder %s24, %s27
      %p33 = scmp.eq.s32.totalorder %s14, 0
      %p34 = por %p32, %p33
      %p35 = scmp.ne.s32.totalorder %s24, %s27
      %p36 = scmp.eq.s32.totalorder %s19, 1
      %p37 = por %p35, %p36
      %p38 = scmp.ne.s32.totalorder %s27, %s28
      %p39 = scmp.eq.s32.totalorder %s19, 0
      %p40 = por %p38, %p39
      %p41 = scmp.ne.s32.totalorder %s27, %s28
      %p42 = scmp.eq.s32.totalorder %s20, 1
      %p43 = por %p41, %p42
      %p45 = scmp.ne.s32.totalorder %s28, %s44
      %p46 = scmp.eq.s32.totalorder %s20, 0
      %p47 = por %p45, %p46
      %s49 = sadd.s32 %s48, 1
      %p52 = scmp.eq.s32.totalorder %s14, 1
      %p53 = scmp.ne.s32.totalorder %s48, %s50
      %p54 = scmp.eq.s32.totalorder %s14, 0
      %p55 = por %p53, %p54
      %p56 = scmp.ne.s32.totalorder %s48, %s50
      %p57 = scmp.eq.s32.totalorder %s19, 1
      %p58 = por %p56, %p57
      %p59 = scmp.ne.s32.totalorder %s50, %s51
      %p60 = scmp.eq.s32.totalorder %s19, 0
      %p61 = por %p59, %p60
      %p62 = scmp.ne.s32.totalorder %s50, %s51
      %p63 = scmp.eq.s32.totalorder %s20, 1
      %p64 = por %p62, %p63
      %p66 = scmp.ne.s32.totalorder %s51, %s65
      %p67 = scmp.eq.s32.totalorder %s20, 0
      %p68 = por %p66, %p67
      %s70 = sadd.s32 %s69, 1
      %p73 = scmp.eq.s32.totalorder %s14, 1
      %p74 = scmp.ne.s32.totalorder %s69, %s71
      %p75 = scmp.eq.s32.totalorder %s14, 0
      %p76 = por %p74, %p75
      %p77 = scmp.ne.s32.totalorder %s69, %s71
      %p78 = scmp.eq.s32.totalorder %s19, 1
      %p79 = por %p77, %p78
      %p80 = scmp.ne.s32.totalorder %s71, %s72
      %p81 = scmp.eq.s32.totalorder %s19, 0
      %p82 = por %p80, %p81
      %p83 = scmp.ne.s32.totalorder %s71, %s72
      %p84 = scmp.eq.s32.totalorder %s20, 1
      %p85 = por %p83, %p84
      %p87 = scmp.ne.s32.totalorder %s72, %s86
      %p88 = scmp.eq.s32.totalorder %s20, 0
      %p89 = por %p87, %p88
      %s91 = sadd.s32 %s90, 1
      %p94 = scmp.eq.s32.totalorder %s14, 1
      %p95 = scmp.ne.s32.totalorder %s90, %s92
      %p96 = scmp.eq.s32.totalorder %s14, 0
      %p97 = por %p95, %p96
      %p98 = scmp.ne.s32.totalorder %s90, %s92
      %p99 = scmp.eq.s32.totalorder %s19, 1
      %p100 = por %p98, %p99
      %p101 = scmp.ne.s32.totalorder %s92, %s93
      %p102 = scmp.eq.s32.totalorder %s19, 0
      %p103 = por %p101, %p102
      %p104 = scmp.ne.s32.totalorder %s92, %s93
      %p105 = scmp.eq.s32.totalorder %s20, 1
      %p106 = por %p104, %p105
      %p108 = scmp.ne.s32.totalorder %s93, %s107
      %p109 = scmp.eq.s32.totalorder %s20, 0
      %p110 = por %p108, %p109
      %s112 = sadd.s32 %s111, 1
      %p115 = scmp.eq.s32.totalorder %s14, 1
      %p116 = scmp.ne.s32.totalorder %s111, %s113
      %p117 = scmp.eq.s32.totalorder %s14, 0
      %p118 = por %p116, %p117
      %p119 = scmp.ne.s32.totalorder %s111, %s113
      %p120 = scmp.eq.s32.totalorder %s19, 1
      %p121 = por %p119, %p120
      %p122 = scmp.ne.s32.totalorder %s113, %s114
      %p123 = scmp.eq.s32.totalorder %s19, 0
      %p124 = por %p122, %p123
      %p125 = scmp.ne.s32.totalorder %s113, %s114
      %p126 = scmp.eq.s32.totalorder %s20, 1
      %p127 = por %p125, %p126
      %p129 = scmp.ne.s32.totalorder %s114, %s128
      %p130 = scmp.eq.s32.totalorder %s20, 0
      %p131 = por %p129, %p130
      %s132 = ssub.s32 %s14, %s21
      %p133 = scmp.eq.s32.totalorder %s132, 0
      %s135 = sadd.s32 %s134, 1
      %s136 = scalar_select %p133, %s134, %s135
      %p139 = pneg %p133
      %p140 = scmp.eq.s32.totalorder %s14, 1
      %p141 = por %p139, %p140
      %p142 = scmp.ne.s32.totalorder %s134, %s137
      %p143 = scmp.eq.s32.totalorder %s14, 0
      %p144 = por %p142, %p143
      %p145 = scmp.ne.s32.totalorder %s134, %s137
      %p146 = scmp.eq.s32.totalorder %s19, 1
      %p147 = por %p145, %p146
      %p148 = scmp.ne.s32.totalorder %s137, %s138
      %p149 = scmp.eq.s32.totalorder %s19, 0
      %p150 = por %p148, %p149
      %p151 = scmp.ne.s32.totalorder %s137, %s138
      %p152 = scmp.eq.s32.totalorder %s20, 1
      %p153 = por %p151, %p152
      %p155 = scmp.ne.s32.totalorder %s138, %s154
      %p156 = scmp.eq.s32.totalorder %s20, 0
      %p157 = por %p155, %p156
      %p158 = scmp.le.s32.totalorder 1, %s14
      %p159 = scmp.lt.s32.totalorder %s14, 3
      %p160 = pnand %p158, %p159
      %p161 = pneg %p160
      // Predicated region
      $region9: #{mhsa_forward.1} parent=5 // pred_check
        _
      $region10: #{mhsa_forward.1} parent=5 // pred_check_branch
        %163 = sbr.rel (%p160) target = $region12
      $region11: #{mhsa_forward.1} parent=5 // pred_region
        %s164 = ssub.s32 %s14, 1
        // Predicated region
        $region13: #{mhsa_forward.1} parent=11 // pred_check
          %p165 = pneg %p61
        $region14: #{mhsa_forward.1} parent=11 // pred_check_branch
          %167 = sbr.rel (%p165) target = $region16
        $region15: #{mhsa_forward.1} parent=11 // pred_region
          _
        $region16: #{mhsa_forward.1} parent=11 // pred_fallthru
          _
        // Predicated region
        $region17: #{mhsa_forward.1} parent=11 // pred_check
          %p168 = pneg %p82
        $region18: #{mhsa_forward.1} parent=11 // pred_check_branch
          %170 = sbr.rel (%p168) target = $region20
        $region19: #{mhsa_forward.1} parent=11 // pred_region
          _
        $region20: #{mhsa_forward.1} parent=11 // pred_fallthru
          _
        // Predicated region
        $region21: #{mhsa_forward.1} parent=11 // pred_check
          %p171 = pneg %p103
        $region22: #{mhsa_forward.1} parent=11 // pred_check_branch
          %173 = sbr.rel (%p171) target = $region24
        $region23: #{mhsa_forward.1} parent=11 // pred_region
          _
        $region24: #{mhsa_forward.1} parent=11 // pred_fallthru
          _
        // Predicated region
        $region25: #{mhsa_forward.1} parent=11 // pred_check
          %p174 = pneg %p124
        $region26: #{mhsa_forward.1} parent=11 // pred_check_branch
          %176 = sbr.rel (%p174) target = $region28
        $region27: #{mhsa_forward.1} parent=11 // pred_region
          _
        $region28: #{mhsa_forward.1} parent=11 // pred_fallthru
          _
      $region12: #{mhsa_forward.1} parent=5 // pred_fallthru
        _
      %p177 = scmp.lt.s32.totalorder %s14, 2
      // Predicated region
      $region29: #{mhsa_forward.1} parent=5 // pred_check
        %p178 = pneg %p177
      $region30: #{mhsa_forward.1} parent=5 // pred_check_branch
        %180 = sbr.rel (%p178) target = $region32
      $region31: #{mhsa_forward.1} parent=5 // pred_region
        // Predicated region
        $region33: #{mhsa_forward.1} parent=31 // pred_check
          %p181 = pneg %p34
        $region34: #{mhsa_forward.1} parent=31 // pred_check_branch
          %183 = sbr.rel (%p181) target = $region36
        $region35: #{mhsa_forward.1} parent=31 // pred_region
          %p184 = scmp.lt.s32.totalorder %s14, 1
          %s185 = scalar_select %p184, %s14, 1
          %s186 = smul.addr %s185, 8
          %s187 = scalar_lea.vmem %s0, %s186
        $region36: #{mhsa_forward.1} parent=31 // pred_fallthru
          _
      $region32: #{mhsa_forward.1} parent=5 // pred_fallthru
        _
      %p188 = scmp.le.s32.totalorder 1, %s14
      %p189 = scmp.lt.s32.totalorder %s14, 3
      %p190 = pnand %p188, %p189
      %p191 = pneg %p190
      // Predicated region
      $region37: #{mhsa_forward.1} parent=5 // pred_check
        _
      $region38: #{mhsa_forward.1} parent=5 // pred_check_branch
        %193 = sbr.rel (%p190) target = $region40
      $region39: #{mhsa_forward.1} parent=5 // pred_region
        %s194 = ssub.s32 %s14, 1
        %p195 = scmp.lt.s32.totalorder %s19, 1
        %s196 = scalar_select %p195, %s19, 1
        %s197 = smul.addr %s196, 8
        %s198 = scalar_lea.vmem %s0, %s197
        %p199 = pneg %p40
        %p200 = pneg %p37
        %p201 = pneg %p61
        %p202 = pneg %p58
        %p203 = pneg %p82
        %p204 = pneg %p79
        %p205 = pneg %p103
        %p206 = pneg %p100
        %p207 = pneg %p124
        %p208 = pneg %p121
        %p209 = pneg %p150
        %p210 = pneg %p147
        %s211 = sand.u32 %s137, 1
        %s212 = scalar_lea.sflag [#allocation5], %s211
        %s213 = sand.u32 %s137, 1
        %s214 = smul.addr %s213, 8
        %s215 = scalar_lea.vmem [#allocation4], %s214
        %p216 = scmp.lt.s32.totalorder %s19, 1
        %s217 = scalar_select %p216, %s19, 1
        %s218 = smul.addr %s217, 8
        %s219 = scalar_lea.vmem %s0, %s218
        %v220 = vld [vmem:[%s219] sm:$0xff]
        %v221 = vld [vmem:[%s1] sm:$0xff]
        %v222 = vld [vmem:[%s1 + $0x8] sm:$0xff]
        %v223 = vld [vmem:[%s1 + $0x10] sm:$0xff]
        %v224 = vld [vmem:[%s1 + $0x18] sm:$0xff]
        %v225 = vld [vmem:[%s2] sm:$0x1]
        %v227 = vlaneseq
        %v228 = vshrl.u32 %v227, 7
        %v229 = vsub.s32 0, %v228
        %v230 = vrot.slane %v225, %v229
        %vm232 = vcmask 261120
        %v234 = vsel %vm232, %v220, 0
        %236 = vmatprep.subr.mxu0 0.0
        %237 = vmatpush1.msra.mxu0 0.0
        %238 = vmatprep.subr.mxu0 0.0
        %239 = vmatpush1.msra.mxu0 0.0
        %240 = vmatprep.subr.mxu0 0.0
        %241 = vmatpush1.msra.mxu0 0.0
        %242 = vmatprep.subr.mxu0 0.0
        %243 = vmatpush1.msra.mxu0 0.0
        %244 = vmatprep.subr.mxu0 0.0
        %245 = vmatpush1.msra.mxu0 0.0
        %246 = vmatprep.subr.mxu0 0.0
        %247 = vmatpush1.msra.mxu0 0.0
        %248 = vmatprep.subr.mxu0 0.0
        %249 = vmatpush1.msra.mxu0 0.0
        %250 = vmatprep.subr.mxu0 0.0
        %251 = vmatpush1.msra.mxu0 0.0
        %252 = vmatprep.subr.mxu0 0.0
        %253 = vmatpush1.msra.mxu0 0.0
        %254 = vmatprep.subr.mxu0 0.0
        %255 = vmatpush1.msra.mxu0 0.0
        %256 = vmatprep.subr.mxu0 0.0
        %257 = vmatpush1.msra.mxu0 0.0
        %258 = vmatprep.subr.mxu0 0.0
        %259 = vmatpush1.msra.mxu0 0.0
        %260 = vmatprep.subr.mxu0 0.0
        %261 = vmatpush1.msra.mxu0 %v224
        %262 = vmatprep.subr.mxu0 0.0
        %263 = vmatpush1.msra.mxu0 %v223
        %264 = vmatprep.subr.mxu0 0.0
        %265 = vmatpush1.msra.mxu0 %v222
        %266 = vmatprep.subr.mxu0 0.0
        %267 = vmatpush1.msra.mxu0 %v221
        %268 = vmatprep.subr.mxu0 0.0
        %269 = vmatpush2.msra.mxu0 0.0
        %270 = vmatprep.subr.mxu0 0.0
        %271 = vmatpush2.msra.mxu0 0.0
        %272 = vmatprep.subr.mxu0 0.0
        %273 = vmatpush2.msra.mxu0 0.0
        %274 = vmatprep.subr.mxu0 0.0
        %275 = vmatpush2.msra.mxu0 0.0
        %276 = vmatprep.subr.mxu0 0.0
        %277 = vmatpush2.msra.mxu0 0.0
        %278 = vmatprep.subr.mxu0 0.0
        %279 = vmatpush2.msra.mxu0 0.0
        %280 = vmatprep.subr.mxu0 0.0
        %281 = vmatpush2.msra.mxu0 0.0
        %282 = vmatprep.subr.mxu0 0.0
        %283 = vmatpush2.msra.mxu0 0.0
        %284 = vmatprep.subr.mxu0 0.0
        %285 = vmatpush2.msra.mxu0 0.0
        %286 = vmatprep.subr.mxu0 0.0
        %287 = vmatpush2.msra.mxu0 0.0
        %288 = vmatprep.subr.mxu0 0.0
        %289 = vmatpush2.msra.mxu0 0.0
        %290 = vmatprep.subr.mxu0 0.0
        %291 = vmatpush2.msra.mxu0 0.0
        %292 = vmatprep.subr.mxu0 0.0
        %293 = vmatpush2.msra.mxu0 0.0
        %294 = vmatprep.subr.mxu0 0.0
        %295 = vmatpush2.msra.mxu0 0.0
        %296 = vmatprep.subr.mxu0 0.0
        %297 = vmatpush2.msra.mxu0 0.0
        %298 = vmatprep.subr.mxu0 0.0
        %299 = vmatpush2.msra.mxu0 0.0
        %300 = vmatprep.mubr.f32.mxu0 0.0
        %301 = vmatmul.mubr.f32.gmra.mxu0 %v234
        %v302 = vpop.f32.mrf.mxu0
        %v303 = vadd.f32 %v230, %v302
        %v304 = vpop.f32.mrf.mxu0
        %305 = vdwg.mxu0
        %vm306 = vcmask 785408
        %307 = vst.msk [vmem:[#allocation2] sm:$0xff] %vm306, %v303
        %v308 = vld [vmem:[#allocation2] sm:$0xff]
        %310 = vrot.lane.b32.xlu0 %v308, 96
        %v311 = vpop.permute.xlu0 %310
        %vm312 = vcmask 31744
        %v313 = vsel %vm312, %v308, 0
        %v315 = vsel %vm312, %v311, 0
        %317 = vmatprep.subr.mxu0 0.0
        %318 = vmatpush1.xpose.msra.mxu0 0.0
        %319 = vmatprep.subr.mxu0 0.0
        %320 = vmatpush1.xpose.msra.mxu0 0.0
        %321 = vmatprep.subr.mxu0 0.0
        %322 = vmatpush1.xpose.msra.mxu0 0.0
        %323 = vmatprep.subr.mxu0 0.0
        %324 = vmatpush1.xpose.msra.mxu0 0.0
        %325 = vmatprep.subr.mxu0 0.0
        %326 = vmatpush1.xpose.msra.mxu0 0.0
        %327 = vmatprep.subr.mxu0 0.0
        %328 = vmatpush1.xpose.msra.mxu0 0.0
        %329 = vmatprep.subr.mxu0 0.0
        %330 = vmatpush1.xpose.msra.mxu0 0.0
        %331 = vmatprep.subr.mxu0 0.0
        %332 = vmatpush1.xpose.msra.mxu0 0.0
        %333 = vmatprep.subr.mxu0 0.0
        %334 = vmatpush1.xpose.msra.mxu0 0.0
        %335 = vmatprep.subr.mxu0 0.0
        %336 = vmatpush1.xpose.msra.mxu0 0.0
        %337 = vmatprep.subr.mxu0 0.0
        %338 = vmatpush1.xpose.msra.mxu0 0.0
        %339 = vmatprep.subr.mxu0 0.0
        %340 = vmatpush1.xpose.msra.mxu0 0.0
        %341 = vmatprep.subr.mxu0 0.0
        %342 = vmatpush1.xpose.msra.mxu0 0.0
        %343 = vmatprep.subr.mxu0 0.0
        %344 = vmatpush1.xpose.msra.mxu0 0.0
        %345 = vmatprep.subr.mxu0 0.0
        %346 = vmatpush1.xpose.msra.mxu0 0.0
        %347 = vmatprep.subr.mxu0 0.0
        %348 = vmatpush1.xpose.msra.mxu0 %v315
        %349 = vmatprep.subr.mxu0 0.0
        %350 = vmatpush2.xpose.msra.mxu0 0.0
        %351 = vmatprep.subr.mxu0 0.0
        %352 = vmatpush2.xpose.msra.mxu0 0.0
        %353 = vmatprep.subr.mxu0 0.0
        %354 = vmatpush2.xpose.msra.mxu0 0.0
        %355 = vmatprep.subr.mxu0 0.0
        %356 = vmatpush2.xpose.msra.mxu0 0.0
        %357 = vmatprep.subr.mxu0 0.0
        %358 = vmatpush2.xpose.msra.mxu0 0.0
        %359 = vmatprep.subr.mxu0 0.0
        %360 = vmatpush2.xpose.msra.mxu0 0.0
        %361 = vmatprep.subr.mxu0 0.0
        %362 = vmatpush2.xpose.msra.mxu0 0.0
        %363 = vmatprep.subr.mxu0 0.0
        %364 = vmatpush2.xpose.msra.mxu0 0.0
        %365 = vmatprep.subr.mxu0 0.0
        %366 = vmatpush2.xpose.msra.mxu0 0.0
        %367 = vmatprep.subr.mxu0 0.0
        %368 = vmatpush2.xpose.msra.mxu0 0.0
        %369 = vmatprep.subr.mxu0 0.0
        %370 = vmatpush2.xpose.msra.mxu0 0.0
        %371 = vmatprep.subr.mxu0 0.0
        %372 = vmatpush2.xpose.msra.mxu0 0.0
        %373 = vmatprep.subr.mxu0 0.0
        %374 = vmatpush2.xpose.msra.mxu0 0.0
        %375 = vmatprep.subr.mxu0 0.0
        %376 = vmatpush2.xpose.msra.mxu0 0.0
        %377 = vmatprep.subr.mxu0 0.0
        %378 = vmatpush2.xpose.msra.mxu0 0.0
        %379 = vmatprep.subr.mxu0 0.0
        %380 = vmatpush2.xpose.msra.mxu0 0.0
        %381 = vmatprep.mubr.f32.mxu0 0.0
        %382 = vmatmul.mubr.f32.gmra.mxu0 %v313
        %v383 = vpop.f32.mrf.mxu0
        %v384 = vadd.f32 0.0, %v383
        %v385 = vpop.f32.mrf.mxu0
        %386 = vdwg.mxu0
        %vm387 = vcmask 64512
        %v388 = vsel %vm387, %v384, -inf
        %389 = vmax.xlane.f32.xlu0 %v388
        %v390 = vpop.xlane.xlu0 %389
        %v391 = vsub.f32 %v384, %v390
        %v392 = vmul.f32 %v391, 1.442695
        %v393 = vpow.pop %v392
        %v394 = vsel %vm387, %v393, 0.0
        %395 = vadd.xlane.f32.xlu0 %v394
        %v396 = vpop.xlane.xlu0 %395
        %397 = vrot.lane.b32.xlu0 %v308, 64
        %v398 = vpop.permute.xlu0 %397
        %v401 = vsel %vm387, %v393, 0
        %403 = vmatprep.subr.mxu0 0.0
        %404 = vmatpush1.msra.mxu0 0.0
        %405 = vmatprep.subr.mxu0 0.0
        %406 = vmatpush1.msra.mxu0 0.0
        %407 = vmatprep.subr.mxu0 0.0
        %408 = vmatpush1.msra.mxu0 0.0
        %409 = vmatprep.subr.mxu0 0.0
        %410 = vmatpush1.msra.mxu0 0.0
        %411 = vmatprep.subr.mxu0 0.0
        %412 = vmatpush1.msra.mxu0 0.0
        %413 = vmatprep.subr.mxu0 0.0
        %414 = vmatpush1.msra.mxu0 0.0
        %415 = vmatprep.subr.mxu0 0.0
        %416 = vmatpush1.msra.mxu0 0.0
        %417 = vmatprep.subr.mxu0 0.0
        %418 = vmatpush1.msra.mxu0 0.0
        %419 = vmatprep.subr.mxu0 0.0
        %420 = vmatpush1.msra.mxu0 0.0
        %421 = vmatprep.subr.mxu0 0.0
        %422 = vmatpush1.msra.mxu0 0.0
        %423 = vmatprep.subr.mxu0 0.0
        %424 = vmatpush1.msra.mxu0 0.0
        %425 = vmatprep.subr.mxu0 0.0
        %426 = vmatpush1.msra.mxu0 0.0
        %427 = vmatprep.subr.mxu0 0.0
        %428 = vmatpush1.msra.mxu0 0.0
        %429 = vmatprep.subr.mxu0 0.0
        %430 = vmatpush1.msra.mxu0 0.0
        %431 = vmatprep.subr.mxu0 0.0
        %432 = vmatpush1.msra.mxu0 0.0
        %433 = vmatprep.subr.mxu0 0.0
        %434 = vmatpush1.msra.mxu0 %v398
        %435 = vmatprep.subr.mxu0 0.0
        %436 = vmatpush2.msra.mxu0 0.0
        %437 = vmatprep.subr.mxu0 0.0
        %438 = vmatpush2.msra.mxu0 0.0
        %439 = vmatprep.subr.mxu0 0.0
        %440 = vmatpush2.msra.mxu0 0.0
        %441 = vmatprep.subr.mxu0 0.0
        %442 = vmatpush2.msra.mxu0 0.0
        %443 = vmatprep.subr.mxu0 0.0
        %444 = vmatpush2.msra.mxu0 0.0
        %445 = vmatprep.subr.mxu0 0.0
        %446 = vmatpush2.msra.mxu0 0.0
        %447 = vmatprep.subr.mxu0 0.0
        %448 = vmatpush2.msra.mxu0 0.0
        %449 = vmatprep.subr.mxu0 0.0
        %450 = vmatpush2.msra.mxu0 0.0
        %451 = vmatprep.subr.mxu0 0.0
        %452 = vmatpush2.msra.mxu0 0.0
        %453 = vmatprep.subr.mxu0 0.0
        %454 = vmatpush2.msra.mxu0 0.0
        %455 = vmatprep.subr.mxu0 0.0
        %456 = vmatpush2.msra.mxu0 0.0
        %457 = vmatprep.subr.mxu0 0.0
        %458 = vmatpush2.msra.mxu0 0.0
        %459 = vmatprep.subr.mxu0 0.0
        %460 = vmatpush2.msra.mxu0 0.0
        %461 = vmatprep.subr.mxu0 0.0
        %462 = vmatpush2.msra.mxu0 0.0
        %463 = vmatprep.subr.mxu0 0.0
        %464 = vmatpush2.msra.mxu0 0.0
        %465 = vmatprep.subr.mxu0 0.0
        %466 = vmatpush2.msra.mxu0 0.0
        %467 = vmatprep.mubr.f32.mxu0 0.0
        %468 = vmatmul.mubr.f32.gmra.mxu0 %v401
        %v469 = vpop.f32.mrf.mxu0
        %v470 = vadd.f32 0.0, %v469
        %v471 = vpop.f32.mrf.mxu0
        %472 = vdwg.mxu0
        %v473 = vrcp.pop %v396
        %v474 = vmul.f32 %v470, %v473
        %475 = vrot.lane.b32.xlu0 %v308, 124
        %v476 = vpop.permute.xlu0 %475
        %477 = vrot.lane.b32.xlu0 %v308, 92
        %v478 = vpop.permute.xlu0 %477
        %v479 = vsel %vm312, %v476, 0
        %v481 = vsel %vm312, %v478, 0
        %483 = vmatprep.subr.mxu0 0.0
        %484 = vmatpush1.xpose.msra.mxu0 0.0
        %485 = vmatprep.subr.mxu0 0.0
        %486 = vmatpush1.xpose.msra.mxu0 0.0
        %487 = vmatprep.subr.mxu0 0.0
        %488 = vmatpush1.xpose.msra.mxu0 0.0
        %489 = vmatprep.subr.mxu0 0.0
        %490 = vmatpush1.xpose.msra.mxu0 0.0
        %491 = vmatprep.subr.mxu0 0.0
        %492 = vmatpush1.xpose.msra.mxu0 0.0
        %493 = vmatprep.subr.mxu0 0.0
        %494 = vmatpush1.xpose.msra.mxu0 0.0
        %495 = vmatprep.subr.mxu0 0.0
        %496 = vmatpush1.xpose.msra.mxu0 0.0
        %497 = vmatprep.subr.mxu0 0.0
        %498 = vmatpush1.xpose.msra.mxu0 0.0
        %499 = vmatprep.subr.mxu0 0.0
        %500 = vmatpush1.xpose.msra.mxu0 0.0
        %501 = vmatprep.subr.mxu0 0.0
        %502 = vmatpush1.xpose.msra.mxu0 0.0
        %503 = vmatprep.subr.mxu0 0.0
        %504 = vmatpush1.xpose.msra.mxu0 0.0
        %505 = vmatprep.subr.mxu0 0.0
        %506 = vmatpush1.xpose.msra.mxu0 0.0
        %507 = vmatprep.subr.mxu0 0.0
        %508 = vmatpush1.xpose.msra.mxu0 0.0
        %509 = vmatprep.subr.mxu0 0.0
        %510 = vmatpush1.xpose.msra.mxu0 0.0
        %511 = vmatprep.subr.mxu0 0.0
        %512 = vmatpush1.xpose.msra.mxu0 0.0
        %513 = vmatprep.subr.mxu0 0.0
        %514 = vmatpush1.xpose.msra.mxu0 %v481
        %515 = vmatprep.subr.mxu0 0.0
        %516 = vmatpush2.xpose.msra.mxu0 0.0
        %517 = vmatprep.subr.mxu0 0.0
        %518 = vmatpush2.xpose.msra.mxu0 0.0
        %519 = vmatprep.subr.mxu0 0.0
        %520 = vmatpush2.xpose.msra.mxu0 0.0
        %521 = vmatprep.subr.mxu0 0.0
        %522 = vmatpush2.xpose.msra.mxu0 0.0
        %523 = vmatprep.subr.mxu0 0.0
        %524 = vmatpush2.xpose.msra.mxu0 0.0
        %525 = vmatprep.subr.mxu0 0.0
        %526 = vmatpush2.xpose.msra.mxu0 0.0
        %527 = vmatprep.subr.mxu0 0.0
        %528 = vmatpush2.xpose.msra.mxu0 0.0
        %529 = vmatprep.subr.mxu0 0.0
        %530 = vmatpush2.xpose.msra.mxu0 0.0
        %531 = vmatprep.subr.mxu0 0.0
        %532 = vmatpush2.xpose.msra.mxu0 0.0
        %533 = vmatprep.subr.mxu0 0.0
        %534 = vmatpush2.xpose.msra.mxu0 0.0
        %535 = vmatprep.subr.mxu0 0.0
        %536 = vmatpush2.xpose.msra.mxu0 0.0
        %537 = vmatprep.subr.mxu0 0.0
        %538 = vmatpush2.xpose.msra.mxu0 0.0
        %539 = vmatprep.subr.mxu0 0.0
        %540 = vmatpush2.xpose.msra.mxu0 0.0
        %541 = vmatprep.subr.mxu0 0.0
        %542 = vmatpush2.xpose.msra.mxu0 0.0
        %543 = vmatprep.subr.mxu0 0.0
        %544 = vmatpush2.xpose.msra.mxu0 0.0
        %545 = vmatprep.subr.mxu0 0.0
        %546 = vmatpush2.xpose.msra.mxu0 0.0
        %547 = vmatprep.mubr.f32.mxu0 0.0
        %548 = vmatmul.mubr.f32.gmra.mxu0 %v479
        %v549 = vpop.f32.mrf.mxu0
        %v550 = vadd.f32 0.0, %v549
        %v551 = vpop.f32.mrf.mxu0
        %552 = vdwg.mxu0
        %v553 = vsel %vm387, %v550, -inf
        %554 = vmax.xlane.f32.xlu0 %v553
        %v555 = vpop.xlane.xlu0 %554
        %v556 = vsub.f32 %v550, %v555
        %v557 = vmul.f32 %v556, 1.442695
        %v558 = vpow.pop %v557
        %v559 = vsel %vm387, %v558, 0.0
        %560 = vadd.xlane.f32.xlu0 %v559
        %v561 = vpop.xlane.xlu0 %560
        %562 = vrot.lane.b32.xlu0 %v308, 60
        %v563 = vpop.permute.xlu0 %562
        %v566 = vsel %vm387, %v558, 0
        %568 = vmatprep.subr.mxu0 0.0
        %569 = vmatpush1.msra.mxu0 0.0
        %570 = vmatprep.subr.mxu0 0.0
        %571 = vmatpush1.msra.mxu0 0.0
        %572 = vmatprep.subr.mxu0 0.0
        %573 = vmatpush1.msra.mxu0 0.0
        %574 = vmatprep.subr.mxu0 0.0
        %575 = vmatpush1.msra.mxu0 0.0
        %576 = vmatprep.subr.mxu0 0.0
        %577 = vmatpush1.msra.mxu0 0.0
        %578 = vmatprep.subr.mxu0 0.0
        %579 = vmatpush1.msra.mxu0 0.0
        %580 = vmatprep.subr.mxu0 0.0
        %581 = vmatpush1.msra.mxu0 0.0
        %582 = vmatprep.subr.mxu0 0.0
        %583 = vmatpush1.msra.mxu0 0.0
        %584 = vmatprep.subr.mxu0 0.0
        %585 = vmatpush1.msra.mxu0 0.0
        %586 = vmatprep.subr.mxu0 0.0
        %587 = vmatpush1.msra.mxu0 0.0
        %588 = vmatprep.subr.mxu0 0.0
        %589 = vmatpush1.msra.mxu0 0.0
        %590 = vmatprep.subr.mxu0 0.0
        %591 = vmatpush1.msra.mxu0 0.0
        %592 = vmatprep.subr.mxu0 0.0
        %593 = vmatpush1.msra.mxu0 0.0
        %594 = vmatprep.subr.mxu0 0.0
        %595 = vmatpush1.msra.mxu0 0.0
        %596 = vmatprep.subr.mxu0 0.0
        %597 = vmatpush1.msra.mxu0 0.0
        %598 = vmatprep.subr.mxu0 0.0
        %599 = vmatpush1.msra.mxu0 %v563
        %600 = vmatprep.subr.mxu0 0.0
        %601 = vmatpush2.msra.mxu0 0.0
        %602 = vmatprep.subr.mxu0 0.0
        %603 = vmatpush2.msra.mxu0 0.0
        %604 = vmatprep.subr.mxu0 0.0
        %605 = vmatpush2.msra.mxu0 0.0
        %606 = vmatprep.subr.mxu0 0.0
        %607 = vmatpush2.msra.mxu0 0.0
        %608 = vmatprep.subr.mxu0 0.0
        %609 = vmatpush2.msra.mxu0 0.0
        %610 = vmatprep.subr.mxu0 0.0
        %611 = vmatpush2.msra.mxu0 0.0
        %612 = vmatprep.subr.mxu0 0.0
        %613 = vmatpush2.msra.mxu0 0.0
        %614 = vmatprep.subr.mxu0 0.0
        %615 = vmatpush2.msra.mxu0 0.0
        %616 = vmatprep.subr.mxu0 0.0
        %617 = vmatpush2.msra.mxu0 0.0
        %618 = vmatprep.subr.mxu0 0.0
        %619 = vmatpush2.msra.mxu0 0.0
        %620 = vmatprep.subr.mxu0 0.0
        %621 = vmatpush2.msra.mxu0 0.0
        %622 = vmatprep.subr.mxu0 0.0
        %623 = vmatpush2.msra.mxu0 0.0
        %624 = vmatprep.subr.mxu0 0.0
        %625 = vmatpush2.msra.mxu0 0.0
        %626 = vmatprep.subr.mxu0 0.0
        %627 = vmatpush2.msra.mxu0 0.0
        %628 = vmatprep.subr.mxu0 0.0
        %629 = vmatpush2.msra.mxu0 0.0
        %630 = vmatprep.subr.mxu0 0.0
        %631 = vmatpush2.msra.mxu0 0.0
        %632 = vmatprep.mubr.f32.mxu0 0.0
        %633 = vmatmul.mubr.f32.gmra.mxu0 %v566
        %v634 = vpop.f32.mrf.mxu0
        %v635 = vadd.f32 0.0, %v634
        %v636 = vpop.f32.mrf.mxu0
        %637 = vdwg.mxu0
        %v638 = vrcp.pop %v561
        %v639 = vmul.f32 %v635, %v638
        %640 = vrot.lane.b32.xlu0 %v308, 120
        %v641 = vpop.permute.xlu0 %640
        %642 = vrot.lane.b32.xlu0 %v308, 88
        %v643 = vpop.permute.xlu0 %642
        %v644 = vsel %vm312, %v641, 0
        %v646 = vsel %vm312, %v643, 0
        %648 = vmatprep.subr.mxu0 0.0
        %649 = vmatpush1.xpose.msra.mxu0 0.0
        %650 = vmatprep.subr.mxu0 0.0
        %651 = vmatpush1.xpose.msra.mxu0 0.0
        %652 = vmatprep.subr.mxu0 0.0
        %653 = vmatpush1.xpose.msra.mxu0 0.0
        %654 = vmatprep.subr.mxu0 0.0
        %655 = vmatpush1.xpose.msra.mxu0 0.0
        %656 = vmatprep.subr.mxu0 0.0
        %657 = vmatpush1.xpose.msra.mxu0 0.0
        %658 = vmatprep.subr.mxu0 0.0
        %659 = vmatpush1.xpose.msra.mxu0 0.0
        %660 = vmatprep.subr.mxu0 0.0
        %661 = vmatpush1.xpose.msra.mxu0 0.0
        %662 = vmatprep.subr.mxu0 0.0
        %663 = vmatpush1.xpose.msra.mxu0 0.0
        %664 = vmatprep.subr.mxu0 0.0
        %665 = vmatpush1.xpose.msra.mxu0 0.0
        %666 = vmatprep.subr.mxu0 0.0
        %667 = vmatpush1.xpose.msra.mxu0 0.0
        %668 = vmatprep.subr.mxu0 0.0
        %669 = vmatpush1.xpose.msra.mxu0 0.0
        %670 = vmatprep.subr.mxu0 0.0
        %671 = vmatpush1.xpose.msra.mxu0 0.0
        %672 = vmatprep.subr.mxu0 0.0
        %673 = vmatpush1.xpose.msra.mxu0 0.0
        %674 = vmatprep.subr.mxu0 0.0
        %675 = vmatpush1.xpose.msra.mxu0 0.0
        %676 = vmatprep.subr.mxu0 0.0
        %677 = vmatpush1.xpose.msra.mxu0 0.0
        %678 = vmatprep.subr.mxu0 0.0
        %679 = vmatpush1.xpose.msra.mxu0 %v646
        %680 = vmatprep.subr.mxu0 0.0
        %681 = vmatpush2.xpose.msra.mxu0 0.0
        %682 = vmatprep.subr.mxu0 0.0
        %683 = vmatpush2.xpose.msra.mxu0 0.0
        %684 = vmatprep.subr.mxu0 0.0
        %685 = vmatpush2.xpose.msra.mxu0 0.0
        %686 = vmatprep.subr.mxu0 0.0
        %687 = vmatpush2.xpose.msra.mxu0 0.0
        %688 = vmatprep.subr.mxu0 0.0
        %689 = vmatpush2.xpose.msra.mxu0 0.0
        %690 = vmatprep.subr.mxu0 0.0
        %691 = vmatpush2.xpose.msra.mxu0 0.0
        %692 = vmatprep.subr.mxu0 0.0
        %693 = vmatpush2.xpose.msra.mxu0 0.0
        %694 = vmatprep.subr.mxu0 0.0
        %695 = vmatpush2.xpose.msra.mxu0 0.0
        %696 = vmatprep.subr.mxu0 0.0
        %697 = vmatpush2.xpose.msra.mxu0 0.0
        %698 = vmatprep.subr.mxu0 0.0
        %699 = vmatpush2.xpose.msra.mxu0 0.0
        %700 = vmatprep.subr.mxu0 0.0
        %701 = vmatpush2.xpose.msra.mxu0 0.0
        %702 = vmatprep.subr.mxu0 0.0
        %703 = vmatpush2.xpose.msra.mxu0 0.0
        %704 = vmatprep.subr.mxu0 0.0
        %705 = vmatpush2.xpose.msra.mxu0 0.0
        %706 = vmatprep.subr.mxu0 0.0
        %707 = vmatpush2.xpose.msra.mxu0 0.0
        %708 = vmatprep.subr.mxu0 0.0
        %709 = vmatpush2.xpose.msra.mxu0 0.0
        %710 = vmatprep.subr.mxu0 0.0
        %711 = vmatpush2.xpose.msra.mxu0 0.0
        %712 = vmatprep.mubr.f32.mxu0 0.0
        %713 = vmatmul.mubr.f32.gmra.mxu0 %v644
        %v714 = vpop.f32.mrf.mxu0
        %v715 = vadd.f32 0.0, %v714
        %v716 = vpop.f32.mrf.mxu0
        %717 = vdwg.mxu0
        %v718 = vsel %vm387, %v715, -inf
        %719 = vmax.xlane.f32.xlu0 %v718
        %v720 = vpop.xlane.xlu0 %719
        %v721 = vsub.f32 %v715, %v720
        %v722 = vmul.f32 %v721, 1.442695
        %v723 = vpow.pop %v722
        %v724 = vsel %vm387, %v723, 0.0
        %725 = vadd.xlane.f32.xlu0 %v724
        %v726 = vpop.xlane.xlu0 %725
        %727 = vrot.lane.b32.xlu0 %v308, 56
        %v728 = vpop.permute.xlu0 %727
        %v731 = vsel %vm387, %v723, 0
        %733 = vmatprep.subr.mxu0 0.0
        %734 = vmatpush1.msra.mxu0 0.0
        %735 = vmatprep.subr.mxu0 0.0
        %736 = vmatpush1.msra.mxu0 0.0
        %737 = vmatprep.subr.mxu0 0.0
        %738 = vmatpush1.msra.mxu0 0.0
        %739 = vmatprep.subr.mxu0 0.0
        %740 = vmatpush1.msra.mxu0 0.0
        %741 = vmatprep.subr.mxu0 0.0
        %742 = vmatpush1.msra.mxu0 0.0
        %743 = vmatprep.subr.mxu0 0.0
        %744 = vmatpush1.msra.mxu0 0.0
        %745 = vmatprep.subr.mxu0 0.0
        %746 = vmatpush1.msra.mxu0 0.0
        %747 = vmatprep.subr.mxu0 0.0
        %748 = vmatpush1.msra.mxu0 0.0
        %749 = vmatprep.subr.mxu0 0.0
        %750 = vmatpush1.msra.mxu0 0.0
        %751 = vmatprep.subr.mxu0 0.0
        %752 = vmatpush1.msra.mxu0 0.0
        %753 = vmatprep.subr.mxu0 0.0
        %754 = vmatpush1.msra.mxu0 0.0
        %755 = vmatprep.subr.mxu0 0.0
        %756 = vmatpush1.msra.mxu0 0.0
        %757 = vmatprep.subr.mxu0 0.0
        %758 = vmatpush1.msra.mxu0 0.0
        %759 = vmatprep.subr.mxu0 0.0
        %760 = vmatpush1.msra.mxu0 0.0
        %761 = vmatprep.subr.mxu0 0.0
        %762 = vmatpush1.msra.mxu0 0.0
        %763 = vmatprep.subr.mxu0 0.0
        %764 = vmatpush1.msra.mxu0 %v728
        %765 = vmatprep.subr.mxu0 0.0
        %766 = vmatpush2.msra.mxu0 0.0
        %767 = vmatprep.subr.mxu0 0.0
        %768 = vmatpush2.msra.mxu0 0.0
        %769 = vmatprep.subr.mxu0 0.0
        %770 = vmatpush2.msra.mxu0 0.0
        %771 = vmatprep.subr.mxu0 0.0
        %772 = vmatpush2.msra.mxu0 0.0
        %773 = vmatprep.subr.mxu0 0.0
        %774 = vmatpush2.msra.mxu0 0.0
        %775 = vmatprep.subr.mxu0 0.0
        %776 = vmatpush2.msra.mxu0 0.0
        %777 = vmatprep.subr.mxu0 0.0
        %778 = vmatpush2.msra.mxu0 0.0
        %779 = vmatprep.subr.mxu0 0.0
        %780 = vmatpush2.msra.mxu0 0.0
        %781 = vmatprep.subr.mxu0 0.0
        %782 = vmatpush2.msra.mxu0 0.0
        %783 = vmatprep.subr.mxu0 0.0
        %784 = vmatpush2.msra.mxu0 0.0
        %785 = vmatprep.subr.mxu0 0.0
        %786 = vmatpush2.msra.mxu0 0.0
        %787 = vmatprep.subr.mxu0 0.0
        %788 = vmatpush2.msra.mxu0 0.0
        %789 = vmatprep.subr.mxu0 0.0
        %790 = vmatpush2.msra.mxu0 0.0
        %791 = vmatprep.subr.mxu0 0.0
        %792 = vmatpush2.msra.mxu0 0.0
        %793 = vmatprep.subr.mxu0 0.0
        %794 = vmatpush2.msra.mxu0 0.0
        %795 = vmatprep.subr.mxu0 0.0
        %796 = vmatpush2.msra.mxu0 0.0
        %797 = vmatprep.mubr.f32.mxu0 0.0
        %798 = vmatmul.mubr.f32.gmra.mxu0 %v731
        %v799 = vpop.f32.mrf.mxu0
        %v800 = vadd.f32 0.0, %v799
        %v801 = vpop.f32.mrf.mxu0
        %802 = vdwg.mxu0
        %v803 = vrcp.pop %v726
        %v804 = vmul.f32 %v800, %v803
        %805 = vrot.lane.b32.xlu0 %v308, 116
        %v806 = vpop.permute.xlu0 %805
        %807 = vrot.lane.b32.xlu0 %v308, 84
        %v808 = vpop.permute.xlu0 %807
        %v809 = vsel %vm312, %v806, 0
        %v811 = vsel %vm312, %v808, 0
        %813 = vmatprep.subr.mxu0 0.0
        %814 = vmatpush1.xpose.msra.mxu0 0.0
        %815 = vmatprep.subr.mxu0 0.0
        %816 = vmatpush1.xpose.msra.mxu0 0.0
        %817 = vmatprep.subr.mxu0 0.0
        %818 = vmatpush1.xpose.msra.mxu0 0.0
        %819 = vmatprep.subr.mxu0 0.0
        %820 = vmatpush1.xpose.msra.mxu0 0.0
        %821 = vmatprep.subr.mxu0 0.0
        %822 = vmatpush1.xpose.msra.mxu0 0.0
        %823 = vmatprep.subr.mxu0 0.0
        %824 = vmatpush1.xpose.msra.mxu0 0.0
        %825 = vmatprep.subr.mxu0 0.0
        %826 = vmatpush1.xpose.msra.mxu0 0.0
        %827 = vmatprep.subr.mxu0 0.0
        %828 = vmatpush1.xpose.msra.mxu0 0.0
        %829 = vmatprep.subr.mxu0 0.0
        %830 = vmatpush1.xpose.msra.mxu0 0.0
        %831 = vmatprep.subr.mxu0 0.0
        %832 = vmatpush1.xpose.msra.mxu0 0.0
        %833 = vmatprep.subr.mxu0 0.0
        %834 = vmatpush1.xpose.msra.mxu0 0.0
        %835 = vmatprep.subr.mxu0 0.0
        %836 = vmatpush1.xpose.msra.mxu0 0.0
        %837 = vmatprep.subr.mxu0 0.0
        %838 = vmatpush1.xpose.msra.mxu0 0.0
        %839 = vmatprep.subr.mxu0 0.0
        %840 = vmatpush1.xpose.msra.mxu0 0.0
        %841 = vmatprep.subr.mxu0 0.0
        %842 = vmatpush1.xpose.msra.mxu0 0.0
        %843 = vmatprep.subr.mxu0 0.0
        %844 = vmatpush1.xpose.msra.mxu0 %v811
        %845 = vmatprep.subr.mxu0 0.0
        %846 = vmatpush2.xpose.msra.mxu0 0.0
        %847 = vmatprep.subr.mxu0 0.0
        %848 = vmatpush2.xpose.msra.mxu0 0.0
        %849 = vmatprep.subr.mxu0 0.0
        %850 = vmatpush2.xpose.msra.mxu0 0.0
        %851 = vmatprep.subr.mxu0 0.0
        %852 = vmatpush2.xpose.msra.mxu0 0.0
        %853 = vmatprep.subr.mxu0 0.0
        %854 = vmatpush2.xpose.msra.mxu0 0.0
        %855 = vmatprep.subr.mxu0 0.0
        %856 = vmatpush2.xpose.msra.mxu0 0.0
        %857 = vmatprep.subr.mxu0 0.0
        %858 = vmatpush2.xpose.msra.mxu0 0.0
        %859 = vmatprep.subr.mxu0 0.0
        %860 = vmatpush2.xpose.msra.mxu0 0.0
        %861 = vmatprep.subr.mxu0 0.0
        %862 = vmatpush2.xpose.msra.mxu0 0.0
        %863 = vmatprep.subr.mxu0 0.0
        %864 = vmatpush2.xpose.msra.mxu0 0.0
        %865 = vmatprep.subr.mxu0 0.0
        %866 = vmatpush2.xpose.msra.mxu0 0.0
        %867 = vmatprep.subr.mxu0 0.0
        %868 = vmatpush2.xpose.msra.mxu0 0.0
        %869 = vmatprep.subr.mxu0 0.0
        %870 = vmatpush2.xpose.msra.mxu0 0.0
        %871 = vmatprep.subr.mxu0 0.0
        %872 = vmatpush2.xpose.msra.mxu0 0.0
        %873 = vmatprep.subr.mxu0 0.0
        %874 = vmatpush2.xpose.msra.mxu0 0.0
        %875 = vmatprep.subr.mxu0 0.0
        %876 = vmatpush2.xpose.msra.mxu0 0.0
        %877 = vmatprep.mubr.f32.mxu0 0.0
        %878 = vmatmul.mubr.f32.gmra.mxu0 %v809
        %v879 = vpop.f32.mrf.mxu0
        %v880 = vadd.f32 0.0, %v879
        %v881 = vpop.f32.mrf.mxu0
        %882 = vdwg.mxu0
        %v883 = vsel %vm387, %v880, -inf
        %884 = vmax.xlane.f32.xlu0 %v883
        %v885 = vpop.xlane.xlu0 %884
        %v886 = vsub.f32 %v880, %v885
        %v887 = vmul.f32 %v886, 1.442695
        %v888 = vpow.pop %v887
        %v889 = vsel %vm387, %v888, 0.0
        %890 = vadd.xlane.f32.xlu0 %v889
        %v891 = vpop.xlane.xlu0 %890
        %892 = vrot.lane.b32.xlu0 %v308, 52
        %v893 = vpop.permute.xlu0 %892
        %v896 = vsel %vm387, %v888, 0
        %898 = vmatprep.subr.mxu0 0.0
        %899 = vmatpush1.msra.mxu0 0.0
        %900 = vmatprep.subr.mxu0 0.0
        %901 = vmatpush1.msra.mxu0 0.0
        %902 = vmatprep.subr.mxu0 0.0
        %903 = vmatpush1.msra.mxu0 0.0
        %904 = vmatprep.subr.mxu0 0.0
        %905 = vmatpush1.msra.mxu0 0.0
        %906 = vmatprep.subr.mxu0 0.0
        %907 = vmatpush1.msra.mxu0 0.0
        %908 = vmatprep.subr.mxu0 0.0
        %909 = vmatpush1.msra.mxu0 0.0
        %910 = vmatprep.subr.mxu0 0.0
        %911 = vmatpush1.msra.mxu0 0.0
        %912 = vmatprep.subr.mxu0 0.0
        %913 = vmatpush1.msra.mxu0 0.0
        %914 = vmatprep.subr.mxu0 0.0
        %915 = vmatpush1.msra.mxu0 0.0
        %916 = vmatprep.subr.mxu0 0.0
        %917 = vmatpush1.msra.mxu0 0.0
        %918 = vmatprep.subr.mxu0 0.0
        %919 = vmatpush1.msra.mxu0 0.0
        %920 = vmatprep.subr.mxu0 0.0
        %921 = vmatpush1.msra.mxu0 0.0
        %922 = vmatprep.subr.mxu0 0.0
        %923 = vmatpush1.msra.mxu0 0.0
        %924 = vmatprep.subr.mxu0 0.0
        %925 = vmatpush1.msra.mxu0 0.0
        %926 = vmatprep.subr.mxu0 0.0
        %927 = vmatpush1.msra.mxu0 0.0
        %928 = vmatprep.subr.mxu0 0.0
        %929 = vmatpush1.msra.mxu0 %v893
        %930 = vmatprep.subr.mxu0 0.0
        %931 = vmatpush2.msra.mxu0 0.0
        %932 = vmatprep.subr.mxu0 0.0
        %933 = vmatpush2.msra.mxu0 0.0
        %934 = vmatprep.subr.mxu0 0.0
        %935 = vmatpush2.msra.mxu0 0.0
        %936 = vmatprep.subr.mxu0 0.0
        %937 = vmatpush2.msra.mxu0 0.0
        %938 = vmatprep.subr.mxu0 0.0
        %939 = vmatpush2.msra.mxu0 0.0
        %940 = vmatprep.subr.mxu0 0.0
        %941 = vmatpush2.msra.mxu0 0.0
        %942 = vmatprep.subr.mxu0 0.0
        %943 = vmatpush2.msra.mxu0 0.0
        %944 = vmatprep.subr.mxu0 0.0
        %945 = vmatpush2.msra.mxu0 0.0
        %946 = vmatprep.subr.mxu0 0.0
        %947 = vmatpush2.msra.mxu0 0.0
        %948 = vmatprep.subr.mxu0 0.0
        %949 = vmatpush2.msra.mxu0 0.0
        %950 = vmatprep.subr.mxu0 0.0
        %951 = vmatpush2.msra.mxu0 0.0
        %952 = vmatprep.subr.mxu0 0.0
        %953 = vmatpush2.msra.mxu0 0.0
        %954 = vmatprep.subr.mxu0 0.0
        %955 = vmatpush2.msra.mxu0 0.0
        %956 = vmatprep.subr.mxu0 0.0
        %957 = vmatpush2.msra.mxu0 0.0
        %958 = vmatprep.subr.mxu0 0.0
        %959 = vmatpush2.msra.mxu0 0.0
        %960 = vmatprep.subr.mxu0 0.0
        %961 = vmatpush2.msra.mxu0 0.0
        %962 = vmatprep.mubr.f32.mxu0 0.0
        %963 = vmatmul.mubr.f32.gmra.mxu0 %v896
        %v964 = vpop.f32.mrf.mxu0
        %v965 = vadd.f32 0.0, %v964
        %v966 = vpop.f32.mrf.mxu0
        %967 = vdwg.mxu0
        %v968 = vrcp.pop %v891
        %v969 = vmul.f32 %v965, %v968
        %970 = vrot.lane.b32.xlu0 %v308, 112
        %v971 = vpop.permute.xlu0 %970
        %972 = vrot.lane.b32.xlu0 %v308, 80
        %v973 = vpop.permute.xlu0 %972
        %v974 = vsel %vm312, %v971, 0
        %v976 = vsel %vm312, %v973, 0
        %978 = vmatprep.subr.mxu0 0.0
        %979 = vmatpush1.xpose.msra.mxu0 0.0
        %980 = vmatprep.subr.mxu0 0.0
        %981 = vmatpush1.xpose.msra.mxu0 0.0
        %982 = vmatprep.subr.mxu0 0.0
        %983 = vmatpush1.xpose.msra.mxu0 0.0
        %984 = vmatprep.subr.mxu0 0.0
        %985 = vmatpush1.xpose.msra.mxu0 0.0
        %986 = vmatprep.subr.mxu0 0.0
        %987 = vmatpush1.xpose.msra.mxu0 0.0
        %988 = vmatprep.subr.mxu0 0.0
        %989 = vmatpush1.xpose.msra.mxu0 0.0
        %990 = vmatprep.subr.mxu0 0.0
        %991 = vmatpush1.xpose.msra.mxu0 0.0
        %992 = vmatprep.subr.mxu0 0.0
        %993 = vmatpush1.xpose.msra.mxu0 0.0
        %994 = vmatprep.subr.mxu0 0.0
        %995 = vmatpush1.xpose.msra.mxu0 0.0
        %996 = vmatprep.subr.mxu0 0.0
        %997 = vmatpush1.xpose.msra.mxu0 0.0
        %998 = vmatprep.subr.mxu0 0.0
        %999 = vmatpush1.xpose.msra.mxu0 0.0
        %1000 = vmatprep.subr.mxu0 0.0
        %1001 = vmatpush1.xpose.msra.mxu0 0.0
        %1002 = vmatprep.subr.mxu0 0.0
        %1003 = vmatpush1.xpose.msra.mxu0 0.0
        %1004 = vmatprep.subr.mxu0 0.0
        %1005 = vmatpush1.xpose.msra.mxu0 0.0
        %1006 = vmatprep.subr.mxu0 0.0
        %1007 = vmatpush1.xpose.msra.mxu0 0.0
        %1008 = vmatprep.subr.mxu0 0.0
        %1009 = vmatpush1.xpose.msra.mxu0 %v976
        %1010 = vmatprep.subr.mxu0 0.0
        %1011 = vmatpush2.xpose.msra.mxu0 0.0
        %1012 = vmatprep.subr.mxu0 0.0
        %1013 = vmatpush2.xpose.msra.mxu0 0.0
        %1014 = vmatprep.subr.mxu0 0.0
        %1015 = vmatpush2.xpose.msra.mxu0 0.0
        %1016 = vmatprep.subr.mxu0 0.0
        %1017 = vmatpush2.xpose.msra.mxu0 0.0
        %1018 = vmatprep.subr.mxu0 0.0
        %1019 = vmatpush2.xpose.msra.mxu0 0.0
        %1020 = vmatprep.subr.mxu0 0.0
        %1021 = vmatpush2.xpose.msra.mxu0 0.0
        %1022 = vmatprep.subr.mxu0 0.0
        %1023 = vmatpush2.xpose.msra.mxu0 0.0
        %1024 = vmatprep.subr.mxu0 0.0
        %1025 = vmatpush2.xpose.msra.mxu0 0.0
        %1026 = vmatprep.subr.mxu0 0.0
        %1027 = vmatpush2.xpose.msra.mxu0 0.0
        %1028 = vmatprep.subr.mxu0 0.0
        %1029 = vmatpush2.xpose.msra.mxu0 0.0
        %1030 = vmatprep.subr.mxu0 0.0
        %1031 = vmatpush2.xpose.msra.mxu0 0.0
        %1032 = vmatprep.subr.mxu0 0.0
        %1033 = vmatpush2.xpose.msra.mxu0 0.0
        %1034 = vmatprep.subr.mxu0 0.0
        %1035 = vmatpush2.xpose.msra.mxu0 0.0
        %1036 = vmatprep.subr.mxu0 0.0
        %1037 = vmatpush2.xpose.msra.mxu0 0.0
        %1038 = vmatprep.subr.mxu0 0.0
        %1039 = vmatpush2.xpose.msra.mxu0 0.0
        %1040 = vmatprep.subr.mxu0 0.0
        %1041 = vmatpush2.xpose.msra.mxu0 0.0
        %1042 = vmatprep.mubr.f32.mxu0 0.0
        %1043 = vmatmul.mubr.f32.gmra.mxu0 %v974
        %v1044 = vpop.f32.mrf.mxu0
        %v1045 = vadd.f32 0.0, %v1044
        %v1046 = vpop.f32.mrf.mxu0
        %1047 = vdwg.mxu0
        %v1048 = vsel %vm387, %v1045, -inf
        %1049 = vmax.xlane.f32.xlu0 %v1048
        %v1050 = vpop.xlane.xlu0 %1049
        %v1051 = vsub.f32 %v1045, %v1050
        %v1052 = vmul.f32 %v1051, 1.442695
        %v1053 = vpow.pop %v1052
        %v1054 = vsel %vm387, %v1053, 0.0
        %1055 = vadd.xlane.f32.xlu0 %v1054
        %v1056 = vpop.xlane.xlu0 %1055
        %1057 = vrot.lane.b32.xlu0 %v308, 48
        %v1058 = vpop.permute.xlu0 %1057
        %v1061 = vsel %vm387, %v1053, 0
        %1063 = vmatprep.subr.mxu0 0.0
        %1064 = vmatpush1.msra.mxu0 0.0
        %1065 = vmatprep.subr.mxu0 0.0
        %1066 = vmatpush1.msra.mxu0 0.0
        %1067 = vmatprep.subr.mxu0 0.0
        %1068 = vmatpush1.msra.mxu0 0.0
        %1069 = vmatprep.subr.mxu0 0.0
        %1070 = vmatpush1.msra.mxu0 0.0
        %1071 = vmatprep.subr.mxu0 0.0
        %1072 = vmatpush1.msra.mxu0 0.0
        %1073 = vmatprep.subr.mxu0 0.0
        %1074 = vmatpush1.msra.mxu0 0.0
        %1075 = vmatprep.subr.mxu0 0.0
        %1076 = vmatpush1.msra.mxu0 0.0
        %1077 = vmatprep.subr.mxu0 0.0
        %1078 = vmatpush1.msra.mxu0 0.0
        %1079 = vmatprep.subr.mxu0 0.0
        %1080 = vmatpush1.msra.mxu0 0.0
        %1081 = vmatprep.subr.mxu0 0.0
        %1082 = vmatpush1.msra.mxu0 0.0
        %1083 = vmatprep.subr.mxu0 0.0
        %1084 = vmatpush1.msra.mxu0 0.0
        %1085 = vmatprep.subr.mxu0 0.0
        %1086 = vmatpush1.msra.mxu0 0.0
        %1087 = vmatprep.subr.mxu0 0.0
        %1088 = vmatpush1.msra.mxu0 0.0
        %1089 = vmatprep.subr.mxu0 0.0
        %1090 = vmatpush1.msra.mxu0 0.0
        %1091 = vmatprep.subr.mxu0 0.0
        %1092 = vmatpush1.msra.mxu0 0.0
        %1093 = vmatprep.subr.mxu0 0.0
        %1094 = vmatpush1.msra.mxu0 %v1058
        %1095 = vmatprep.subr.mxu0 0.0
        %1096 = vmatpush2.msra.mxu0 0.0
        %1097 = vmatprep.subr.mxu0 0.0
        %1098 = vmatpush2.msra.mxu0 0.0
        %1099 = vmatprep.subr.mxu0 0.0
        %1100 = vmatpush2.msra.mxu0 0.0
        %1101 = vmatprep.subr.mxu0 0.0
        %1102 = vmatpush2.msra.mxu0 0.0
        %1103 = vmatprep.subr.mxu0 0.0
        %1104 = vmatpush2.msra.mxu0 0.0
        %1105 = vmatprep.subr.mxu0 0.0
        %1106 = vmatpush2.msra.mxu0 0.0
        %1107 = vmatprep.subr.mxu0 0.0
        %1108 = vmatpush2.msra.mxu0 0.0
        %1109 = vmatprep.subr.mxu0 0.0
        %1110 = vmatpush2.msra.mxu0 0.0
        %1111 = vmatprep.subr.mxu0 0.0
        %1112 = vmatpush2.msra.mxu0 0.0
        %1113 = vmatprep.subr.mxu0 0.0
        %1114 = vmatpush2.msra.mxu0 0.0
        %1115 = vmatprep.subr.mxu0 0.0
        %1116 = vmatpush2.msra.mxu0 0.0
        %1117 = vmatprep.subr.mxu0 0.0
        %1118 = vmatpush2.msra.mxu0 0.0
        %1119 = vmatprep.subr.mxu0 0.0
        %1120 = vmatpush2.msra.mxu0 0.0
        %1121 = vmatprep.subr.mxu0 0.0
        %1122 = vmatpush2.msra.mxu0 0.0
        %1123 = vmatprep.subr.mxu0 0.0
        %1124 = vmatpush2.msra.mxu0 0.0
        %1125 = vmatprep.subr.mxu0 0.0
        %1126 = vmatpush2.msra.mxu0 0.0
        %1127 = vmatprep.mubr.f32.mxu0 0.0
        %1128 = vmatmul.mubr.f32.gmra.mxu0 %v1061
        %v1129 = vpop.f32.mrf.mxu0
        %v1130 = vadd.f32 0.0, %v1129
        %v1131 = vpop.f32.mrf.mxu0
        %1132 = vdwg.mxu0
        %v1133 = vrcp.pop %v1056
        %v1134 = vmul.f32 %v1130, %v1133
        %1135 = vrot.lane.b32.xlu0 %v308, 108
        %v1136 = vpop.permute.xlu0 %1135
        %1137 = vrot.lane.b32.xlu0 %v308, 76
        %v1138 = vpop.permute.xlu0 %1137
        %v1139 = vsel %vm312, %v1136, 0
        %v1141 = vsel %vm312, %v1138, 0
        %1143 = vmatprep.subr.mxu0 0.0
        %1144 = vmatpush1.xpose.msra.mxu0 0.0
        %1145 = vmatprep.subr.mxu0 0.0
        %1146 = vmatpush1.xpose.msra.mxu0 0.0
        %1147 = vmatprep.subr.mxu0 0.0
        %1148 = vmatpush1.xpose.msra.mxu0 0.0
        %1149 = vmatprep.subr.mxu0 0.0
        %1150 = vmatpush1.xpose.msra.mxu0 0.0
        %1151 = vmatprep.subr.mxu0 0.0
        %1152 = vmatpush1.xpose.msra.mxu0 0.0
        %1153 = vmatprep.subr.mxu0 0.0
        %1154 = vmatpush1.xpose.msra.mxu0 0.0
        %1155 = vmatprep.subr.mxu0 0.0
        %1156 = vmatpush1.xpose.msra.mxu0 0.0
        %1157 = vmatprep.subr.mxu0 0.0
        %1158 = vmatpush1.xpose.msra.mxu0 0.0
        %1159 = vmatprep.subr.mxu0 0.0
        %1160 = vmatpush1.xpose.msra.mxu0 0.0
        %1161 = vmatprep.subr.mxu0 0.0
        %1162 = vmatpush1.xpose.msra.mxu0 0.0
        %1163 = vmatprep.subr.mxu0 0.0
        %1164 = vmatpush1.xpose.msra.mxu0 0.0
        %1165 = vmatprep.subr.mxu0 0.0
        %1166 = vmatpush1.xpose.msra.mxu0 0.0
        %1167 = vmatprep.subr.mxu0 0.0
        %1168 = vmatpush1.xpose.msra.mxu0 0.0
        %1169 = vmatprep.subr.mxu0 0.0
        %1170 = vmatpush1.xpose.msra.mxu0 0.0
        %1171 = vmatprep.subr.mxu0 0.0
        %1172 = vmatpush1.xpose.msra.mxu0 0.0
        %1173 = vmatprep.subr.mxu0 0.0
        %1174 = vmatpush1.xpose.msra.mxu0 %v1141
        %1175 = vmatprep.subr.mxu0 0.0
        %1176 = vmatpush2.xpose.msra.mxu0 0.0
        %1177 = vmatprep.subr.mxu0 0.0
        %1178 = vmatpush2.xpose.msra.mxu0 0.0
        %1179 = vmatprep.subr.mxu0 0.0
        %1180 = vmatpush2.xpose.msra.mxu0 0.0
        %1181 = vmatprep.subr.mxu0 0.0
        %1182 = vmatpush2.xpose.msra.mxu0 0.0
        %1183 = vmatprep.subr.mxu0 0.0
        %1184 = vmatpush2.xpose.msra.mxu0 0.0
        %1185 = vmatprep.subr.mxu0 0.0
        %1186 = vmatpush2.xpose.msra.mxu0 0.0
        %1187 = vmatprep.subr.mxu0 0.0
        %1188 = vmatpush2.xpose.msra.mxu0 0.0
        %1189 = vmatprep.subr.mxu0 0.0
        %1190 = vmatpush2.xpose.msra.mxu0 0.0
        %1191 = vmatprep.subr.mxu0 0.0
        %1192 = vmatpush2.xpose.msra.mxu0 0.0
        %1193 = vmatprep.subr.mxu0 0.0
        %1194 = vmatpush2.xpose.msra.mxu0 0.0
        %1195 = vmatprep.subr.mxu0 0.0
        %1196 = vmatpush2.xpose.msra.mxu0 0.0
        %1197 = vmatprep.subr.mxu0 0.0
        %1198 = vmatpush2.xpose.msra.mxu0 0.0
        %1199 = vmatprep.subr.mxu0 0.0
        %1200 = vmatpush2.xpose.msra.mxu0 0.0
        %1201 = vmatprep.subr.mxu0 0.0
        %1202 = vmatpush2.xpose.msra.mxu0 0.0
        %1203 = vmatprep.subr.mxu0 0.0
        %1204 = vmatpush2.xpose.msra.mxu0 0.0
        %1205 = vmatprep.subr.mxu0 0.0
        %1206 = vmatpush2.xpose.msra.mxu0 0.0
        %1207 = vmatprep.mubr.f32.mxu0 0.0
        %1208 = vmatmul.mubr.f32.gmra.mxu0 %v1139
        %v1209 = vpop.f32.mrf.mxu0
        %v1210 = vadd.f32 0.0, %v1209
        %v1211 = vpop.f32.mrf.mxu0
        %1212 = vdwg.mxu0
        %v1213 = vsel %vm387, %v1210, -inf
        %1214 = vmax.xlane.f32.xlu0 %v1213
        %v1215 = vpop.xlane.xlu0 %1214
        %v1216 = vsub.f32 %v1210, %v1215
        %v1217 = vmul.f32 %v1216, 1.442695
        %v1218 = vpow.pop %v1217
        %v1219 = vsel %vm387, %v1218, 0.0
        %1220 = vadd.xlane.f32.xlu0 %v1219
        %v1221 = vpop.xlane.xlu0 %1220
        %1222 = vrot.lane.b32.xlu0 %v308, 44
        %v1223 = vpop.permute.xlu0 %1222
        %v1226 = vsel %vm387, %v1218, 0
        %1228 = vmatprep.subr.mxu0 0.0
        %1229 = vmatpush1.msra.mxu0 0.0
        %1230 = vmatprep.subr.mxu0 0.0
        %1231 = vmatpush1.msra.mxu0 0.0
        %1232 = vmatprep.subr.mxu0 0.0
        %1233 = vmatpush1.msra.mxu0 0.0
        %1234 = vmatprep.subr.mxu0 0.0
        %1235 = vmatpush1.msra.mxu0 0.0
        %1236 = vmatprep.subr.mxu0 0.0
        %1237 = vmatpush1.msra.mxu0 0.0
        %1238 = vmatprep.subr.mxu0 0.0
        %1239 = vmatpush1.msra.mxu0 0.0
        %1240 = vmatprep.subr.mxu0 0.0
        %1241 = vmatpush1.msra.mxu0 0.0
        %1242 = vmatprep.subr.mxu0 0.0
        %1243 = vmatpush1.msra.mxu0 0.0
        %1244 = vmatprep.subr.mxu0 0.0
        %1245 = vmatpush1.msra.mxu0 0.0
        %1246 = vmatprep.subr.mxu0 0.0
        %1247 = vmatpush1.msra.mxu0 0.0
        %1248 = vmatprep.subr.mxu0 0.0
        %1249 = vmatpush1.msra.mxu0 0.0
        %1250 = vmatprep.subr.mxu0 0.0
        %1251 = vmatpush1.msra.mxu0 0.0
        %1252 = vmatprep.subr.mxu0 0.0
        %1253 = vmatpush1.msra.mxu0 0.0
        %1254 = vmatprep.subr.mxu0 0.0
        %1255 = vmatpush1.msra.mxu0 0.0
        %1256 = vmatprep.subr.mxu0 0.0
        %1257 = vmatpush1.msra.mxu0 0.0
        %1258 = vmatprep.subr.mxu0 0.0
        %1259 = vmatpush1.msra.mxu0 %v1223
        %1260 = vmatprep.subr.mxu0 0.0
        %1261 = vmatpush2.msra.mxu0 0.0
        %1262 = vmatprep.subr.mxu0 0.0
        %1263 = vmatpush2.msra.mxu0 0.0
        %1264 = vmatprep.subr.mxu0 0.0
        %1265 = vmatpush2.msra.mxu0 0.0
        %1266 = vmatprep.subr.mxu0 0.0
        %1267 = vmatpush2.msra.mxu0 0.0
        %1268 = vmatprep.subr.mxu0 0.0
        %1269 = vmatpush2.msra.mxu0 0.0
        %1270 = vmatprep.subr.mxu0 0.0
        %1271 = vmatpush2.msra.mxu0 0.0
        %1272 = vmatprep.subr.mxu0 0.0
        %1273 = vmatpush2.msra.mxu0 0.0
        %1274 = vmatprep.subr.mxu0 0.0
        %1275 = vmatpush2.msra.mxu0 0.0
        %1276 = vmatprep.subr.mxu0 0.0
        %1277 = vmatpush2.msra.mxu0 0.0
        %1278 = vmatprep.subr.mxu0 0.0
        %1279 = vmatpush2.msra.mxu0 0.0
        %1280 = vmatprep.subr.mxu0 0.0
        %1281 = vmatpush2.msra.mxu0 0.0
        %1282 = vmatprep.subr.mxu0 0.0
        %1283 = vmatpush2.msra.mxu0 0.0
        %1284 = vmatprep.subr.mxu0 0.0
        %1285 = vmatpush2.msra.mxu0 0.0
        %1286 = vmatprep.subr.mxu0 0.0
        %1287 = vmatpush2.msra.mxu0 0.0
        %1288 = vmatprep.subr.mxu0 0.0
        %1289 = vmatpush2.msra.mxu0 0.0
        %1290 = vmatprep.subr.mxu0 0.0
        %1291 = vmatpush2.msra.mxu0 0.0
        %1292 = vmatprep.mubr.f32.mxu0 0.0
        %1293 = vmatmul.mubr.f32.gmra.mxu0 %v1226
        %v1294 = vpop.f32.mrf.mxu0
        %v1295 = vadd.f32 0.0, %v1294
        %v1296 = vpop.f32.mrf.mxu0
        %1297 = vdwg.mxu0
        %v1298 = vrcp.pop %v1221
        %v1299 = vmul.f32 %v1295, %v1298
        %1300 = vrot.lane.b32.xlu0 %v308, 104
        %v1301 = vpop.permute.xlu0 %1300
        %1302 = vrot.lane.b32.xlu0 %v308, 72
        %v1303 = vpop.permute.xlu0 %1302
        %v1304 = vsel %vm312, %v1301, 0
        %v1306 = vsel %vm312, %v1303, 0
        %1308 = vmatprep.subr.mxu0 0.0
        %1309 = vmatpush1.xpose.msra.mxu0 0.0
        %1310 = vmatprep.subr.mxu0 0.0
        %1311 = vmatpush1.xpose.msra.mxu0 0.0
        %1312 = vmatprep.subr.mxu0 0.0
        %1313 = vmatpush1.xpose.msra.mxu0 0.0
        %1314 = vmatprep.subr.mxu0 0.0
        %1315 = vmatpush1.xpose.msra.mxu0 0.0
        %1316 = vmatprep.subr.mxu0 0.0
        %1317 = vmatpush1.xpose.msra.mxu0 0.0
        %1318 = vmatprep.subr.mxu0 0.0
        %1319 = vmatpush1.xpose.msra.mxu0 0.0
        %1320 = vmatprep.subr.mxu0 0.0
        %1321 = vmatpush1.xpose.msra.mxu0 0.0
        %1322 = vmatprep.subr.mxu0 0.0
        %1323 = vmatpush1.xpose.msra.mxu0 0.0
        %1324 = vmatprep.subr.mxu0 0.0
        %1325 = vmatpush1.xpose.msra.mxu0 0.0
        %1326 = vmatprep.subr.mxu0 0.0
        %1327 = vmatpush1.xpose.msra.mxu0 0.0
        %1328 = vmatprep.subr.mxu0 0.0
        %1329 = vmatpush1.xpose.msra.mxu0 0.0
        %1330 = vmatprep.subr.mxu0 0.0
        %1331 = vmatpush1.xpose.msra.mxu0 0.0
        %1332 = vmatprep.subr.mxu0 0.0
        %1333 = vmatpush1.xpose.msra.mxu0 0.0
        %1334 = vmatprep.subr.mxu0 0.0
        %1335 = vmatpush1.xpose.msra.mxu0 0.0
        %1336 = vmatprep.subr.mxu0 0.0
        %1337 = vmatpush1.xpose.msra.mxu0 0.0
        %1338 = vmatprep.subr.mxu0 0.0
        %1339 = vmatpush1.xpose.msra.mxu0 %v1306
        %1340 = vmatprep.subr.mxu0 0.0
        %1341 = vmatpush2.xpose.msra.mxu0 0.0
        %1342 = vmatprep.subr.mxu0 0.0
        %1343 = vmatpush2.xpose.msra.mxu0 0.0
        %1344 = vmatprep.subr.mxu0 0.0
        %1345 = vmatpush2.xpose.msra.mxu0 0.0
        %1346 = vmatprep.subr.mxu0 0.0
        %1347 = vmatpush2.xpose.msra.mxu0 0.0
        %1348 = vmatprep.subr.mxu0 0.0
        %1349 = vmatpush2.xpose.msra.mxu0 0.0
        %1350 = vmatprep.subr.mxu0 0.0
        %1351 = vmatpush2.xpose.msra.mxu0 0.0
        %1352 = vmatprep.subr.mxu0 0.0
        %1353 = vmatpush2.xpose.msra.mxu0 0.0
        %1354 = vmatprep.subr.mxu0 0.0
        %1355 = vmatpush2.xpose.msra.mxu0 0.0
        %1356 = vmatprep.subr.mxu0 0.0
        %1357 = vmatpush2.xpose.msra.mxu0 0.0
        %1358 = vmatprep.subr.mxu0 0.0
        %1359 = vmatpush2.xpose.msra.mxu0 0.0
        %1360 = vmatprep.subr.mxu0 0.0
        %1361 = vmatpush2.xpose.msra.mxu0 0.0
        %1362 = vmatprep.subr.mxu0 0.0
        %1363 = vmatpush2.xpose.msra.mxu0 0.0
        %1364 = vmatprep.subr.mxu0 0.0
        %1365 = vmatpush2.xpose.msra.mxu0 0.0
        %1366 = vmatprep.subr.mxu0 0.0
        %1367 = vmatpush2.xpose.msra.mxu0 0.0
        %1368 = vmatprep.subr.mxu0 0.0
        %1369 = vmatpush2.xpose.msra.mxu0 0.0
        %1370 = vmatprep.subr.mxu0 0.0
        %1371 = vmatpush2.xpose.msra.mxu0 0.0
        %1372 = vmatprep.mubr.f32.mxu0 0.0
        %1373 = vmatmul.mubr.f32.gmra.mxu0 %v1304
        %v1374 = vpop.f32.mrf.mxu0
        %v1375 = vadd.f32 0.0, %v1374
        %v1376 = vpop.f32.mrf.mxu0
        %1377 = vdwg.mxu0
        %v1378 = vsel %vm387, %v1375, -inf
        %1379 = vmax.xlane.f32.xlu0 %v1378
        %v1380 = vpop.xlane.xlu0 %1379
        %v1381 = vsub.f32 %v1375, %v1380
        %v1382 = vmul.f32 %v1381, 1.442695
        %v1383 = vpow.pop %v1382
        %v1384 = vsel %vm387, %v1383, 0.0
        %1385 = vadd.xlane.f32.xlu0 %v1384
        %v1386 = vpop.xlane.xlu0 %1385
        %1387 = vrot.lane.b32.xlu0 %v308, 40
        %v1388 = vpop.permute.xlu0 %1387
        %v1391 = vsel %vm387, %v1383, 0
        %1393 = vmatprep.subr.mxu0 0.0
        %1394 = vmatpush1.msra.mxu0 0.0
        %1395 = vmatprep.subr.mxu0 0.0
        %1396 = vmatpush1.msra.mxu0 0.0
        %1397 = vmatprep.subr.mxu0 0.0
        %1398 = vmatpush1.msra.mxu0 0.0
        %1399 = vmatprep.subr.mxu0 0.0
        %1400 = vmatpush1.msra.mxu0 0.0
        %1401 = vmatprep.subr.mxu0 0.0
        %1402 = vmatpush1.msra.mxu0 0.0
        %1403 = vmatprep.subr.mxu0 0.0
        %1404 = vmatpush1.msra.mxu0 0.0
        %1405 = vmatprep.subr.mxu0 0.0
        %1406 = vmatpush1.msra.mxu0 0.0
        %1407 = vmatprep.subr.mxu0 0.0
        %1408 = vmatpush1.msra.mxu0 0.0
        %1409 = vmatprep.subr.mxu0 0.0
        %1410 = vmatpush1.msra.mxu0 0.0
        %1411 = vmatprep.subr.mxu0 0.0
        %1412 = vmatpush1.msra.mxu0 0.0
        %1413 = vmatprep.subr.mxu0 0.0
        %1414 = vmatpush1.msra.mxu0 0.0
        %1415 = vmatprep.subr.mxu0 0.0
        %1416 = vmatpush1.msra.mxu0 0.0
        %1417 = vmatprep.subr.mxu0 0.0
        %1418 = vmatpush1.msra.mxu0 0.0
        %1419 = vmatprep.subr.mxu0 0.0
        %1420 = vmatpush1.msra.mxu0 0.0
        %1421 = vmatprep.subr.mxu0 0.0
        %1422 = vmatpush1.msra.mxu0 0.0
        %1423 = vmatprep.subr.mxu0 0.0
        %1424 = vmatpush1.msra.mxu0 %v1388
        %1425 = vmatprep.subr.mxu0 0.0
        %1426 = vmatpush2.msra.mxu0 0.0
        %1427 = vmatprep.subr.mxu0 0.0
        %1428 = vmatpush2.msra.mxu0 0.0
        %1429 = vmatprep.subr.mxu0 0.0
        %1430 = vmatpush2.msra.mxu0 0.0
        %1431 = vmatprep.subr.mxu0 0.0
        %1432 = vmatpush2.msra.mxu0 0.0
        %1433 = vmatprep.subr.mxu0 0.0
        %1434 = vmatpush2.msra.mxu0 0.0
        %1435 = vmatprep.subr.mxu0 0.0
        %1436 = vmatpush2.msra.mxu0 0.0
        %1437 = vmatprep.subr.mxu0 0.0
        %1438 = vmatpush2.msra.mxu0 0.0
        %1439 = vmatprep.subr.mxu0 0.0
        %1440 = vmatpush2.msra.mxu0 0.0
        %1441 = vmatprep.subr.mxu0 0.0
        %1442 = vmatpush2.msra.mxu0 0.0
        %1443 = vmatprep.subr.mxu0 0.0
        %1444 = vmatpush2.msra.mxu0 0.0
        %1445 = vmatprep.subr.mxu0 0.0
        %1446 = vmatpush2.msra.mxu0 0.0
        %1447 = vmatprep.subr.mxu0 0.0
        %1448 = vmatpush2.msra.mxu0 0.0
        %1449 = vmatprep.subr.mxu0 0.0
        %1450 = vmatpush2.msra.mxu0 0.0
        %1451 = vmatprep.subr.mxu0 0.0
        %1452 = vmatpush2.msra.mxu0 0.0
        %1453 = vmatprep.subr.mxu0 0.0
        %1454 = vmatpush2.msra.mxu0 0.0
        %1455 = vmatprep.subr.mxu0 0.0
        %1456 = vmatpush2.msra.mxu0 0.0
        %1457 = vmatprep.mubr.f32.mxu0 0.0
        %1458 = vmatmul.mubr.f32.gmra.mxu0 %v1391
        %v1459 = vpop.f32.mrf.mxu0
        %v1460 = vadd.f32 0.0, %v1459
        %v1461 = vpop.f32.mrf.mxu0
        %1462 = vdwg.mxu0
        %v1463 = vrcp.pop %v1386
        %v1464 = vmul.f32 %v1460, %v1463
        %1465 = vrot.lane.b32.xlu0 %v308, 100
        %v1466 = vpop.permute.xlu0 %1465
        %1467 = vrot.lane.b32.xlu0 %v308, 68
        %v1468 = vpop.permute.xlu0 %1467
        %v1469 = vsel %vm312, %v1466, 0
        %v1471 = vsel %vm312, %v1468, 0
        %1473 = vmatprep.subr.mxu0 0.0
        %1474 = vmatpush1.xpose.msra.mxu0 0.0
        %1475 = vmatprep.subr.mxu0 0.0
        %1476 = vmatpush1.xpose.msra.mxu0 0.0
        %1477 = vmatprep.subr.mxu0 0.0
        %1478 = vmatpush1.xpose.msra.mxu0 0.0
        %1479 = vmatprep.subr.mxu0 0.0
        %1480 = vmatpush1.xpose.msra.mxu0 0.0
        %1481 = vmatprep.subr.mxu0 0.0
        %1482 = vmatpush1.xpose.msra.mxu0 0.0
        %1483 = vmatprep.subr.mxu0 0.0
        %1484 = vmatpush1.xpose.msra.mxu0 0.0
        %1485 = vmatprep.subr.mxu0 0.0
        %1486 = vmatpush1.xpose.msra.mxu0 0.0
        %1487 = vmatprep.subr.mxu0 0.0
        %1488 = vmatpush1.xpose.msra.mxu0 0.0
        %1489 = vmatprep.subr.mxu0 0.0
        %1490 = vmatpush1.xpose.msra.mxu0 0.0
        %1491 = vmatprep.subr.mxu0 0.0
        %1492 = vmatpush1.xpose.msra.mxu0 0.0
        %1493 = vmatprep.subr.mxu0 0.0
        %1494 = vmatpush1.xpose.msra.mxu0 0.0
        %1495 = vmatprep.subr.mxu0 0.0
        %1496 = vmatpush1.xpose.msra.mxu0 0.0
        %1497 = vmatprep.subr.mxu0 0.0
        %1498 = vmatpush1.xpose.msra.mxu0 0.0
        %1499 = vmatprep.subr.mxu0 0.0
        %1500 = vmatpush1.xpose.msra.mxu0 0.0
        %1501 = vmatprep.subr.mxu0 0.0
        %1502 = vmatpush1.xpose.msra.mxu0 0.0
        %1503 = vmatprep.subr.mxu0 0.0
        %1504 = vmatpush1.xpose.msra.mxu0 %v1471
        %1505 = vmatprep.subr.mxu0 0.0
        %1506 = vmatpush2.xpose.msra.mxu0 0.0
        %1507 = vmatprep.subr.mxu0 0.0
        %1508 = vmatpush2.xpose.msra.mxu0 0.0
        %1509 = vmatprep.subr.mxu0 0.0
        %1510 = vmatpush2.xpose.msra.mxu0 0.0
        %1511 = vmatprep.subr.mxu0 0.0
        %1512 = vmatpush2.xpose.msra.mxu0 0.0
        %1513 = vmatprep.subr.mxu0 0.0
        %1514 = vmatpush2.xpose.msra.mxu0 0.0
        %1515 = vmatprep.subr.mxu0 0.0
        %1516 = vmatpush2.xpose.msra.mxu0 0.0
        %1517 = vmatprep.subr.mxu0 0.0
        %1518 = vmatpush2.xpose.msra.mxu0 0.0
        %1519 = vmatprep.subr.mxu0 0.0
        %1520 = vmatpush2.xpose.msra.mxu0 0.0
        %1521 = vmatprep.subr.mxu0 0.0
        %1522 = vmatpush2.xpose.msra.mxu0 0.0
        %1523 = vmatprep.subr.mxu0 0.0
        %1524 = vmatpush2.xpose.msra.mxu0 0.0
        %1525 = vmatprep.subr.mxu0 0.0
        %1526 = vmatpush2.xpose.msra.mxu0 0.0
        %1527 = vmatprep.subr.mxu0 0.0
        %1528 = vmatpush2.xpose.msra.mxu0 0.0
        %1529 = vmatprep.subr.mxu0 0.0
        %1530 = vmatpush2.xpose.msra.mxu0 0.0
        %1531 = vmatprep.subr.mxu0 0.0
        %1532 = vmatpush2.xpose.msra.mxu0 0.0
        %1533 = vmatprep.subr.mxu0 0.0
        %1534 = vmatpush2.xpose.msra.mxu0 0.0
        %1535 = vmatprep.subr.mxu0 0.0
        %1536 = vmatpush2.xpose.msra.mxu0 0.0
        %1537 = vmatprep.mubr.f32.mxu0 0.0
        %1538 = vmatmul.mubr.f32.gmra.mxu0 %v1469
        %v1539 = vpop.f32.mrf.mxu0
        %v1540 = vadd.f32 0.0, %v1539
        %v1541 = vpop.f32.mrf.mxu0
        %1542 = vdwg.mxu0
        %v1543 = vsel %vm387, %v1540, -inf
        %1544 = vmax.xlane.f32.xlu0 %v1543
        %v1545 = vpop.xlane.xlu0 %1544
        %v1546 = vsub.f32 %v1540, %v1545
        %v1547 = vmul.f32 %v1546, 1.442695
        %v1548 = vpow.pop %v1547
        %v1549 = vsel %vm387, %v1548, 0.0
        %1550 = vadd.xlane.f32.xlu0 %v1549
        %v1551 = vpop.xlane.xlu0 %1550
        %1552 = vrot.lane.b32.xlu0 %v308, 36
        %v1553 = vpop.permute.xlu0 %1552
        %v1556 = vsel %vm387, %v1548, 0
        %1558 = vmatprep.subr.mxu0 0.0
        %1559 = vmatpush1.msra.mxu0 0.0
        %1560 = vmatprep.subr.mxu0 0.0
        %1561 = vmatpush1.msra.mxu0 0.0
        %1562 = vmatprep.subr.mxu0 0.0
        %1563 = vmatpush1.msra.mxu0 0.0
        %1564 = vmatprep.subr.mxu0 0.0
        %1565 = vmatpush1.msra.mxu0 0.0
        %1566 = vmatprep.subr.mxu0 0.0
        %1567 = vmatpush1.msra.mxu0 0.0
        %1568 = vmatprep.subr.mxu0 0.0
        %1569 = vmatpush1.msra.mxu0 0.0
        %1570 = vmatprep.subr.mxu0 0.0
        %1571 = vmatpush1.msra.mxu0 0.0
        %1572 = vmatprep.subr.mxu0 0.0
        %1573 = vmatpush1.msra.mxu0 0.0
        %1574 = vmatprep.subr.mxu0 0.0
        %1575 = vmatpush1.msra.mxu0 0.0
        %1576 = vmatprep.subr.mxu0 0.0
        %1577 = vmatpush1.msra.mxu0 0.0
        %1578 = vmatprep.subr.mxu0 0.0
        %1579 = vmatpush1.msra.mxu0 0.0
        %1580 = vmatprep.subr.mxu0 0.0
        %1581 = vmatpush1.msra.mxu0 0.0
        %1582 = vmatprep.subr.mxu0 0.0
        %1583 = vmatpush1.msra.mxu0 0.0
        %1584 = vmatprep.subr.mxu0 0.0
        %1585 = vmatpush1.msra.mxu0 0.0
        %1586 = vmatprep.subr.mxu0 0.0
        %1587 = vmatpush1.msra.mxu0 0.0
        %1588 = vmatprep.subr.mxu0 0.0
        %1589 = vmatpush1.msra.mxu0 %v1553
        %1590 = vmatprep.subr.mxu0 0.0
        %1591 = vmatpush2.msra.mxu0 0.0
        %1592 = vmatprep.subr.mxu0 0.0
        %1593 = vmatpush2.msra.mxu0 0.0
        %1594 = vmatprep.subr.mxu0 0.0
        %1595 = vmatpush2.msra.mxu0 0.0
        %1596 = vmatprep.subr.mxu0 0.0
        %1597 = vmatpush2.msra.mxu0 0.0
        %1598 = vmatprep.subr.mxu0 0.0
        %1599 = vmatpush2.msra.mxu0 0.0
        %1600 = vmatprep.subr.mxu0 0.0
        %1601 = vmatpush2.msra.mxu0 0.0
        %1602 = vmatprep.subr.mxu0 0.0
        %1603 = vmatpush2.msra.mxu0 0.0
        %1604 = vmatprep.subr.mxu0 0.0
        %1605 = vmatpush2.msra.mxu0 0.0
        %1606 = vmatprep.subr.mxu0 0.0
        %1607 = vmatpush2.msra.mxu0 0.0
        %1608 = vmatprep.subr.mxu0 0.0
        %1609 = vmatpush2.msra.mxu0 0.0
        %1610 = vmatprep.subr.mxu0 0.0
        %1611 = vmatpush2.msra.mxu0 0.0
        %1612 = vmatprep.subr.mxu0 0.0
        %1613 = vmatpush2.msra.mxu0 0.0
        %1614 = vmatprep.subr.mxu0 0.0
        %1615 = vmatpush2.msra.mxu0 0.0
        %1616 = vmatprep.subr.mxu0 0.0
        %1617 = vmatpush2.msra.mxu0 0.0
        %1618 = vmatprep.subr.mxu0 0.0
        %1619 = vmatpush2.msra.mxu0 0.0
        %1620 = vmatprep.subr.mxu0 0.0
        %1621 = vmatpush2.msra.mxu0 0.0
        %1622 = vmatprep.mubr.f32.mxu0 0.0
        %1623 = vmatmul.mubr.f32.gmra.mxu0 %v1556
        %v1624 = vpop.f32.mrf.mxu0
        %v1625 = vadd.f32 0.0, %v1624
        %v1626 = vpop.f32.mrf.mxu0
        %1627 = vdwg.mxu0
        %v1628 = vrcp.pop %v1551
        %v1629 = vmul.f32 %v1625, %v1628
        %1631 = vrot.lane.b32.xlu0 %v639, 4
        %v1632 = vpop.permute.xlu0 %1631
        %1635 = vrot.lane.b32.xlu0 %v804, 8
        %v1636 = vpop.permute.xlu0 %1635
        %1639 = vrot.lane.b32.xlu0 %v969, 12
        %v1640 = vpop.permute.xlu0 %1639
        %1643 = vrot.lane.b32.xlu0 %v1134, 16
        %v1644 = vpop.permute.xlu0 %1643
        %1647 = vrot.lane.b32.xlu0 %v1299, 20
        %v1648 = vpop.permute.xlu0 %1647
        %1651 = vrot.lane.b32.xlu0 %v1464, 24
        %v1652 = vpop.permute.xlu0 %1651
        %1655 = vrot.lane.b32.xlu0 %v1629, 28
        %v1656 = vpop.permute.xlu0 %1655
        %v1658 = vsel %vm312, %v474, %v1632
        %v1659 = vsel %vm387, %v1658, %v1636
        %vm1660 = vcmask 97280
        %v1661 = vsel %vm1660, %v1659, %v1640
        %vm1662 = vcmask 130048
        %v1663 = vsel %vm1662, %v1661, %v1644
        %vm1664 = vcmask 162816
        %v1665 = vsel %vm1664, %v1663, %v1648
        %vm1666 = vcmask 195584
        %v1667 = vsel %vm1666, %v1665, %v1652
        %vm1668 = vcmask 228352
        %v1669 = vsel %vm1668, %v1667, %v1656
        %1670 = vst.msk [vmem:[#allocation3] sm:$0xff] %vm232, %v1669
        %v1671 = vld [vmem:[#allocation3] sm:$0xff]
        %v1672 = vld [vmem:[%s3] sm:$0xff]
        %v1673 = vld [vmem:[%s3 + $0x8] sm:$0xff]
        %v1674 = vld [vmem:[%s3 + $0x10] sm:$0xff]
        %v1675 = vld [vmem:[%s3 + $0x18] sm:$0xff]
        %v1676 = vld [vmem:[%s4] sm:$0x1]
        %v1678 = vlaneseq
        %v1679 = vshrl.u32 %v1678, 7
        %v1680 = vsub.s32 0, %v1679
        %v1681 = vrot.slane %v1676, %v1680
        %v1684 = vsel %vm232, %v1671, 0
        %1686 = vmatprep.subr.mxu0 0.0
        %1687 = vmatpush1.msra.mxu0 0.0
        %1688 = vmatprep.subr.mxu0 0.0
        %1689 = vmatpush1.msra.mxu0 0.0
        %1690 = vmatprep.subr.mxu0 0.0
        %1691 = vmatpush1.msra.mxu0 0.0
        %1692 = vmatprep.subr.mxu0 0.0
        %1693 = vmatpush1.msra.mxu0 0.0
        %1694 = vmatprep.subr.mxu0 0.0
        %1695 = vmatpush1.msra.mxu0 0.0
        %1696 = vmatprep.subr.mxu0 0.0
        %1697 = vmatpush1.msra.mxu0 0.0
        %1698 = vmatprep.subr.mxu0 0.0
        %1699 = vmatpush1.msra.mxu0 0.0
        %1700 = vmatprep.subr.mxu0 0.0
        %1701 = vmatpush1.msra.mxu0 0.0
        %1702 = vmatprep.subr.mxu0 0.0
        %1703 = vmatpush1.msra.mxu0 0.0
        %1704 = vmatprep.subr.mxu0 0.0
        %1705 = vmatpush1.msra.mxu0 0.0
        %1706 = vmatprep.subr.mxu0 0.0
        %1707 = vmatpush1.msra.mxu0 0.0
        %1708 = vmatprep.subr.mxu0 0.0
        %1709 = vmatpush1.msra.mxu0 0.0
        %1710 = vmatprep.subr.mxu0 0.0
        %1711 = vmatpush1.msra.mxu0 %v1675
        %1712 = vmatprep.subr.mxu0 0.0
        %1713 = vmatpush1.msra.mxu0 %v1674
        %1714 = vmatprep.subr.mxu0 0.0
        %1715 = vmatpush1.msra.mxu0 %v1673
        %1716 = vmatprep.subr.mxu0 0.0
        %1717 = vmatpush1.msra.mxu0 %v1672
        %1718 = vmatprep.subr.mxu0 0.0
        %1719 = vmatpush2.msra.mxu0 0.0
        %1720 = vmatprep.subr.mxu0 0.0
        %1721 = vmatpush2.msra.mxu0 0.0
        %1722 = vmatprep.subr.mxu0 0.0
        %1723 = vmatpush2.msra.mxu0 0.0
        %1724 = vmatprep.subr.mxu0 0.0
        %1725 = vmatpush2.msra.mxu0 0.0
        %1726 = vmatprep.subr.mxu0 0.0
        %1727 = vmatpush2.msra.mxu0 0.0
        %1728 = vmatprep.subr.mxu0 0.0
        %1729 = vmatpush2.msra.mxu0 0.0
        %1730 = vmatprep.subr.mxu0 0.0
        %1731 = vmatpush2.msra.mxu0 0.0
        %1732 = vmatprep.subr.mxu0 0.0
        %1733 = vmatpush2.msra.mxu0 0.0
        %1734 = vmatprep.subr.mxu0 0.0
        %1735 = vmatpush2.msra.mxu0 0.0
        %1736 = vmatprep.subr.mxu0 0.0
        %1737 = vmatpush2.msra.mxu0 0.0
        %1738 = vmatprep.subr.mxu0 0.0
        %1739 = vmatpush2.msra.mxu0 0.0
        %1740 = vmatprep.subr.mxu0 0.0
        %1741 = vmatpush2.msra.mxu0 0.0
        %1742 = vmatprep.subr.mxu0 0.0
        %1743 = vmatpush2.msra.mxu0 0.0
        %1744 = vmatprep.subr.mxu0 0.0
        %1745 = vmatpush2.msra.mxu0 0.0
        %1746 = vmatprep.subr.mxu0 0.0
        %1747 = vmatpush2.msra.mxu0 0.0
        %1748 = vmatprep.subr.mxu0 0.0
        %1749 = vmatpush2.msra.mxu0 0.0
        %1750 = vmatprep.mubr.f32.mxu0 0.0
        %1751 = vmatmul.mubr.f32.gmra.mxu0 %v1684
        %v1752 = vpop.f32.mrf.mxu0
        %v1753 = vadd.f32 %v1681, %v1752
        %v1754 = vpop.f32.mrf.mxu0
        %1755 = vdwg.mxu0
        %1756 = vst.msk [vmem:[%s215] sm:$0xff] %vm232, %v1753
        %s1757 = sand.u32 %s137, 1
        %s1758 = scalar_lea.sflag [#allocation5], %s1757
        %s1759 = sand.u32 %s137, 1
        %s1760 = smul.addr %s1759, 8
        %s1761 = scalar_lea.vmem [#allocation4], %s1760
        // Predicated region
        $region41: #{mhsa_forward.1} parent=39 // pred_check
          %p1762 = pneg %p147
        $region42: #{mhsa_forward.1} parent=39 // pred_check_branch
          %1764 = sbr.rel (%p1762) target = $region44
        $region43: #{mhsa_forward.1} parent=39 // pred_region
          %s1766 = ssub.s32 128, 128
          %1767 = vsyncadd %s1758, %s1766
          %s1768 = smul.addr %s19, 128
          %s1769 = scalar_lea.hbm %s5, %s1768
          %s1771 = sshll.u32 %s1761, 4
          %s1772 = int_to_ptr.vmem [resolvable:$true] %s1771
          %1774 = dma.vmem_to_hbm [thread:$0]  %s1772, 128, %s1769, %s1758
        $region44: #{mhsa_forward.1} parent=39 // pred_fallthru
          _
      $region40: #{mhsa_forward.1} parent=5 // pred_fallthru
        _
      %p1775 = scmp.le.s32.totalorder 2, %s14
      // Predicated region
      $region45: #{mhsa_forward.1} parent=5 // pred_check
        %p1776 = pneg %p1775
      $region46: #{mhsa_forward.1} parent=5 // pred_check_branch
        %1778 = sbr.rel (%p1776) target = $region48
      $region47: #{mhsa_forward.1} parent=5 // pred_region
        %s1779 = ssub.s32 %s14, 2
        // Predicated region
        $region49: #{mhsa_forward.1} parent=47 // pred_check
          %p1780 = pneg %p153
        $region50: #{mhsa_forward.1} parent=47 // pred_check_branch
          %1782 = sbr.rel (%p1780) target = $region52
        $region51: #{mhsa_forward.1} parent=47 // pred_region
          %s1783 = sand.u32 %s138, 1
          %s1784 = scalar_lea.sflag [#allocation5], %s1783
          %s1785 = sand.u32 %s138, 1
          %s1786 = smul.addr %s1785, 8
          %s1787 = scalar_lea.vmem [#allocation4], %s1786
          %1788 = dma.done %s1784, 128
        $region52: #{mhsa_forward.1} parent=47 // pred_fallthru
          _
      $region48: #{mhsa_forward.1} parent=5 // pred_fallthru
        _
    $region6: #{mhsa_forward.1} parent=1 // loop_footer
      %s18 = sadd.s32 1, %s14
    $region7: #{mhsa_forward.1} parent=1 // loop_footer_branch
      %13 = sbr.rel target = $region3
    $region8: #{mhsa_forward.1} parent=1 // loop_exit
      _
    %1789 = vsyncpa [#allocation5], 1
    %s1790 = scalar_lea.sflag [#allocation5], 1
    %1791 = vsyncpa %s1790, 1

</llo_original>
